<compile_context>
chip_gen: v7x
topology: tpu7x:2x2x1
jax: 0.10.0
libtpu: 0.0.40
codegen_flags: <defaults>
</compile_context>

<pallas_src>
import numpy as np
import jax
import jax.numpy as jnp
from jax import lax
from jax.experimental import pallas as pl
from jax.experimental.pallas import tpu as pltpu


def _make_swap_crops_kernel(cr_v, cr_h, mask_width):
    cr_v, cr_h, mw = int(cr_v), int(cr_h), int(mask_width)

    def _split3_f32(v):
        # exact 3-way bf16-chunk split of f32 data (v == p1 + p2 + p3 exactly)
        v = v.astype(jnp.float32)
        p1 = v.astype(jnp.bfloat16).astype(jnp.float32)
        rem = v - p1
        p2 = rem.astype(jnp.bfloat16).astype(jnp.float32)
        p3 = rem - p2
        return p1, p2, p3

    def _shift_cols(rows, sel):
        # "Move a column window" as a matmul with a 0/1 selection matrix.
        # MXU is idle in this kernel, so this is free; the split keeps the
        # result exact whatever f32 matmul decomposition the MXU uses.
        p1, p2, p3 = _split3_f32(rows)
        dot = lambda p: jnp.dot(p, sel, preferred_element_type=jnp.float32)
        return (dot(p1) + dot(p2)) + dot(p3)

    def kernel(pos_ref, x_ref, out_ref, mask_ref):
        _, H, W = out_ref.shape
        dtype = out_ref.dtype
        tv1, th1 = pos_ref[0], pos_ref[1]
        tv2, th2 = pos_ref[2], pos_ref[3]

        # ---------------- swapped-crops output ----------------
        out_ref[...] = x_ref[...]                       # start from the original slice

        # Original-input row bands covering both crops (dynamic sublane ds,
        # full lane width).  Both crops read the ORIGINAL input, as in torch.
        rows1 = x_ref[0, pl.ds(tv1, cr_v), :]           # (cr_v, W)
        rows2 = x_ref[0, pl.ds(tv2, cr_v), :]

        # 0/1 column-shift matrices from iota compares (no dynamic lane slicing).
        a = lax.broadcasted_iota(jnp.int32, (W, W), 0)  # source column
        b = lax.broadcasted_iota(jnp.int32, (W, W), 1)  # destination column
        one = jnp.ones((), jnp.float32)
        zero = jnp.zeros((), jnp.float32)
        s12 = jnp.where(a - b == th2 - th1, one, zero)  # dest col th1+k <- src col th2+k
        s21 = jnp.where(a - b == th1 - th2, one, zero)  # dest col th2+k <- src col th1+k

        col = lax.broadcasted_iota(jnp.int32, (1, W), 1)
        colband1 = (col >= th1) & (col < th1 + cr_h)    # (1, W)
        colband2 = (col >= th2) & (col < th2 + cr_h)

        # region 1: crop 2 -> rows [tv1, tv1+cr_v), cols [th1, th1+cr_h)
        patch1 = jnp.where(colband1, _shift_cols(rows2, s12).astype(dtype), rows1)
        out_ref[0, pl.ds(tv1, cr_v), :] = patch1

        # region 2: crop 1 -> rows [tv2, tv2+cr_v), cols [th2, th2+cr_h).
        # Background is the CURRENT output rows so an overlapping region-1
        # write survives outside region 2's columns (sequential torch writes).
        bg2 = out_ref[0, pl.ds(tv2, cr_v), :]
        patch2 = jnp.where(colband2, _shift_cols(rows1, s21).astype(dtype), bg2)
        out_ref[0, pl.ds(tv2, cr_v), :] = patch2

        # ---------------- loss mask (computed over (H, W) only) ----------------
        def norm(idx, L):
            # Python/torch slice-index normalization (scalar/sreg only):
            # wrap negatives by +L, clamp to [0, L].
            idx = jnp.where(idx < 0, idx + L, idx)
            return jnp.clip(idx, 0, L)

        rects = []
        for tv, th in ((tv1, th1), (tv2, th2)):
            rects += [
                (tv, tv + cr_v, th - mw, th + mw),
                (tv - mw, tv + mw, th, th + cr_h),
                (tv, tv + cr_v, th + cr_h - mw, th + cr_h + mw),
                (tv + cr_v - mw, tv + cr_v + mw, th, th + cr_h),
            ]
        # hoist all scalar boundary normalization ahead of the vector compares
        rects = [(norm(v0, H), norm(v1, H), norm(h0, W), norm(h1, W))
                 for (v0, v1, h0, h1) in rects]

        r_i = lax.broadcasted_iota(jnp.int32, (H, W), 0)
        c_i = lax.broadcasted_iota(jnp.int32, (H, W), 1)
        zmask = None
        for v0, v1, h0, h1 in rects:
            rect = (r_i >= v0) & (r_i < v1) & (c_i >= h0) & (c_i < h1)
            zmask = rect if zmask is None else (zmask | rect)
        mask_ref[0] = jnp.where(zmask, jnp.zeros((), dtype), jnp.ones((), dtype))

    return kernel


def swap_crops_pallas(x_nchw, pos, cr_v, cr_h, mask_width):
    """x_nchw: (N, C, H, W). pos: int32[4] = [tv1, th1, tv2, th2]."""
    N, C, H, W = x_nchw.shape
    NC = N * C
    x3 = x_nchw.reshape(NC, H, W)   # pure reshape; no transposes / HBM shuffles

    kernel = _make_swap_crops_kernel(cr_v, cr_h, mask_width)
    out3, mask3 = pl.pallas_call(
        kernel,
        out_shape=(jax.ShapeDtypeStruct((NC, H, W), x_nchw.dtype),
                   jax.ShapeDtypeStruct((NC, H, W), x_nchw.dtype)),
        grid=(NC,),
        in_specs=[
            pl.BlockSpec(memory_space=pltpu.MemorySpace.SMEM),   # crop positions
            pl.BlockSpec((1, H, W), lambda i: (i, 0, 0)),        # image slice
        ],
        out_specs=(
            pl.BlockSpec((1, H, W), lambda i: (i, 0, 0)),        # swapped slice
            pl.BlockSpec((1, H, W), lambda i: (i, 0, 0)),        # loss-mask slice
        ),
        compiler_params=pltpu.CompilerParams(
            dimension_semantics=("parallel",)),                  # megacore on v7x
    )(pos, x3)

    return out3.reshape(N, C, H, W), mask3.reshape(N, C, H, W)


if __name__ == "__main__":
    # SwapCrops(min_crop_size=4, max_crop_size=8, mask_width=2) on a small input.
    N, C, H, W = 2, 4, 16, 16
    min_crop_size, max_crop_size, mask_width = 4, 8, 2

    key = jax.random.PRNGKey(0)
    x = jax.random.normal(key, (N, C, H, W), dtype=jnp.float32)

    # Deterministic replay of the module's host-side numpy randomness.
    rng = np.random.RandomState(0)
    cr = np.uint32(rng.rand(2) * (max_crop_size - min_crop_size) + min_crop_size)
    cr_v, cr_h = int(cr[0]), int(cr[1])
    tv1 = int(rng.randint(0, H - cr_v))
    th1 = int(rng.randint(0, W - cr_h))
    tv2 = int(rng.randint(0, H - cr_v))
    th2 = int(rng.randint(0, W - cr_h))
    pos = jnp.array([tv1, th1, tv2, th2], dtype=jnp.int32)

    out, mask = swap_crops_pallas(x, pos, cr_v, cr_h, mask_width)
    out = jax.block_until_ready(out)
    mask = jax.block_until_ready(mask)

    # numpy reference mirroring the PyTorch forward exactly
    xn = np.asarray(x)
    ref_out = xn.copy()
    ref_out[:, :, tv1:tv1 + cr_v, th1:th1 + cr_h] = xn[:, :, tv2:tv2 + cr_v, th2:th2 + cr_h]
    ref_out[:, :, tv2:tv2 + cr_v, th2:th2 + cr_h] = xn[:, :, tv1:tv1 + cr_v, th1:th1 + cr_h]
    ref_mask = np.ones_like(xn)
    mw = mask_width
    for (tv, th) in [(tv1, th1), (tv2, th2)]:
        ref_mask[:, :, tv:tv + cr_v, th - mw:th + mw] = 0
        ref_mask[:, :, tv - mw:tv + mw, th:th + cr_h] = 0
        ref_mask[:, :, tv:tv + cr_v, th + cr_h - mw:th + cr_h + mw] = 0
        ref_mask[:, :, tv + cr_v - mw:tv + cr_v + mw, th:th + cr_h] = 0

    # swap goes through an exact 0/1-matrix MXU select (error <= ~1e-9 rel)
    np.testing.assert_allclose(np.asarray(out), ref_out, rtol=0, atol=1e-6)
    np.testing.assert_allclose(np.asarray(mask), ref_mask, rtol=0, atol=0)
    print("KERNEL_OK")
</pallas_src>

<mosaic_0001>
module attributes {stable_mosaic.version = 11 : i64} {
  func.func @kernel(%arg0: i32, %arg1: memref<4xi32, #tpu.memory_space<smem>>, %arg2: memref<1x16x16xf32, #tpu.memory_space<vmem>>, %arg3: memref<1x16x16xf32, #tpu.memory_space<vmem>>, %arg4: memref<1x16x16xf32, #tpu.memory_space<vmem>>) attributes {dimension_semantics = [#tpu.dimension_semantics<parallel>], iteration_bounds = array<i64: 8>, scalar_prefetch = 0 : i64, scratch_operands = 0 : i64, tpu.core_type = #tpu.core_type<tc>, window_params = [{transform_indices = @transform_0, window_bounds = array<i64: 4>}, {transform_indices = @transform_1, window_bounds = array<i64: 1, 16, 16>}, {transform_indices = @transform_2, window_bounds = array<i64: 1, 16, 16>}, {transform_indices = @transform_3, window_bounds = array<i64: 1, 16, 16>}]} {
    %c0 = arith.constant 0 : index
    %0 = memref.load %arg1[%c0] : memref<4xi32, #tpu.memory_space<smem>>
    %c1 = arith.constant 1 : index
    %1 = memref.load %arg1[%c1] : memref<4xi32, #tpu.memory_space<smem>>
    %c2 = arith.constant 2 : index
    %2 = memref.load %arg1[%c2] : memref<4xi32, #tpu.memory_space<smem>>
    %c3 = arith.constant 3 : index
    %3 = memref.load %arg1[%c3] : memref<4xi32, #tpu.memory_space<smem>>
    %c0_0 = arith.constant 0 : index
    %c0_1 = arith.constant 0 : index
    %c0_2 = arith.constant 0 : index
    %4 = vector.load %arg2[%c0_0, %c0_1, %c0_2] : memref<1x16x16xf32, #tpu.memory_space<vmem>>, vector<1x16x16xf32>
    %c0_3 = arith.constant 0 : index
    %c0_4 = arith.constant 0 : index
    %c0_5 = arith.constant 0 : index
    %5 = vector.load %arg3[%c0_3, %c0_4, %c0_5] : memref<1x16x16xf32, #tpu.memory_space<vmem>>, vector<1x16x16xf32>
    tpu.vector_store %arg3[%c0_3, %c0_4, %c0_5], %4 {strides = array<i32>} : memref<1x16x16xf32, #tpu.memory_space<vmem>>, vector<1x16x16xf32>,
    %c0_6 = arith.constant 0 : index
    %6 = arith.index_cast %0 : i32 to index
    %c0_7 = arith.constant 0 : index
    %7 = vector.load %arg2[%c0_6, %6, %c0_7] : memref<1x16x16xf32, #tpu.memory_space<vmem>>, vector<1x6x16xf32>
    %8 = vector.shape_cast %7 : vector<1x6x16xf32> to vector<6x16xf32>
    %c0_8 = arith.constant 0 : index
    %9 = arith.index_cast %2 : i32 to index
    %c0_9 = arith.constant 0 : index
    %10 = vector.load %arg2[%c0_8, %9, %c0_9] : memref<1x16x16xf32, #tpu.memory_space<vmem>>, vector<1x6x16xf32>
    %11 = vector.shape_cast %10 : vector<1x6x16xf32> to vector<6x16xf32>
    %12 = tpu.iota {dimensions = array<i32: 0>} : vector<16x16xi32>
    %13 = tpu.iota {dimensions = array<i32: 1>} : vector<16x16xi32>
    %14 = arith.subi %12, %13 : vector<16x16xi32>
    %15 = arith.subi %3, %1 : i32
    %16 = vector.broadcast %15 : i32 to vector<16x16xi32>
    %17 = arith.cmpi eq, %14, %16 : vector<16x16xi32>
    %cst = arith.constant 1.000000e+00 : f32
    %cst_10 = arith.constant 0.000000e+00 : f32
    %18 = vector.broadcast %cst : f32 to vector<16x16xf32>
    %19 = vector.broadcast %cst_10 : f32 to vector<16x16xf32>
    %20 = arith.select %17, %18, %19 : vector<16x16xi1>, vector<16x16xf32>
    %21 = arith.subi %12, %13 : vector<16x16xi32>
    %22 = arith.subi %1, %3 : i32
    %23 = vector.broadcast %22 : i32 to vector<16x16xi32>
    %24 = arith.cmpi eq, %21, %23 : vector<16x16xi32>
    %cst_11 = arith.constant 1.000000e+00 : f32
    %cst_12 = arith.constant 0.000000e+00 : f32
    %25 = vector.broadcast %cst_11 : f32 to vector<16x16xf32>
    %26 = vector.broadcast %cst_12 : f32 to vector<16x16xf32>
    %27 = arith.select %24, %25, %26 : vector<16x16xi1>, vector<16x16xf32>
    %28 = tpu.iota {dimensions = array<i32: 1>} : vector<1x16xi32>
    %29 = vector.broadcast %1 : i32 to vector<1x16xi32>
    %30 = arith.cmpi sge, %28, %29 : vector<1x16xi32>
    %c6_i32 = arith.constant 6 : i32
    %31 = arith.addi %1, %c6_i32 : i32
    %32 = vector.broadcast %31 : i32 to vector<1x16xi32>
    %33 = arith.cmpi slt, %28, %32 : vector<1x16xi32>
    %34 = arith.andi %30, %33 : vector<1x16xi1>
    %35 = vector.broadcast %3 : i32 to vector<1x16xi32>
    %36 = arith.cmpi sge, %28, %35 : vector<1x16xi32>
    %c6_i32_13 = arith.constant 6 : i32
    %37 = arith.addi %3, %c6_i32_13 : i32
    %38 = vector.broadcast %37 : i32 to vector<1x16xi32>
    %39 = arith.cmpi slt, %28, %38 : vector<1x16xi32>
    %40 = arith.andi %36, %39 : vector<1x16xi1>
    %41 = arith.truncf %11 : vector<6x16xf32> to vector<6x16xbf16>
    %42 = arith.extf %41 : vector<6x16xbf16> to vector<6x16xf32>
    %43 = arith.subf %11, %42 : vector<6x16xf32>
    %44 = arith.truncf %43 : vector<6x16xf32> to vector<6x16xbf16>
    %45 = arith.extf %44 : vector<6x16xbf16> to vector<6x16xf32>
    %46 = arith.subf %43, %45 : vector<6x16xf32>
    %cst_14 = arith.constant dense<0.000000e+00> : vector<6x16xf32>
    %47 = tpu.matmul %42, %20, %cst_14 {dimension_numbers = #tpu.dot_dimension_numbers<[1], [0], [0], [1], [0, 0, 1, 1], [], []>} : vector<6x16xf32>, vector<16x16xf32>, vector<6x16xf32> -> vector<6x16xf32>
    %cst_15 = arith.constant dense<0.000000e+00> : vector<6x16xf32>
    %48 = tpu.matmul %45, %20, %cst_15 {dimension_numbers = #tpu.dot_dimension_numbers<[1], [0], [0], [1], [0, 0, 1, 1], [], []>} : vector<6x16xf32>, vector<16x16xf32>, vector<6x16xf32> -> vector<6x16xf32>
    %49 = arith.addf %47, %48 : vector<6x16xf32>
    %cst_16 = arith.constant dense<0.000000e+00> : vector<6x16xf32>
    %50 = tpu.matmul %46, %20, %cst_16 {dimension_numbers = #tpu.dot_dimension_numbers<[1], [0], [0], [1], [0, 0, 1, 1], [], []>} : vector<6x16xf32>, vector<16x16xf32>, vector<6x16xf32> -> vector<6x16xf32>
    %51 = arith.addf %49, %50 : vector<6x16xf32>
    %52 = vector.shape_cast %34 : vector<1x16xi1> to vector<1x16xi1>
    %53 = vector.broadcast %52 : vector<1x16xi1> to vector<6x16xi1>
    %54 = arith.select %53, %51, %8 : vector<6x16xi1>, vector<6x16xf32>
    %c0_17 = arith.constant 0 : index
    %55 = arith.index_cast %0 : i32 to index
    %c0_18 = arith.constant 0 : index
    %56 = vector.load %arg3[%c0_17, %55, %c0_18] : memref<1x16x16xf32, #tpu.memory_space<vmem>>, vector<1x6x16xf32>
    %57 = vector.shape_cast %56 : vector<1x6x16xf32> to vector<6x16xf32>
    %58 = vector.shape_cast %54 : vector<6x16xf32> to vector<1x6x16xf32>
    tpu.vector_store %arg3[%c0_17, %55, %c0_18], %58 {strides = array<i32>} : memref<1x16x16xf32, #tpu.memory_space<vmem>>, vector<1x6x16xf32>,
    %c0_19 = arith.constant 0 : index
    %59 = arith.index_cast %2 : i32 to index
    %c0_20 = arith.constant 0 : index
    %60 = vector.load %arg3[%c0_19, %59, %c0_20] : memref<1x16x16xf32, #tpu.memory_space<vmem>>, vector<1x6x16xf32>
    %61 = vector.shape_cast %60 : vector<1x6x16xf32> to vector<6x16xf32>
    %62 = arith.truncf %8 : vector<6x16xf32> to vector<6x16xbf16>
    %63 = arith.extf %62 : vector<6x16xbf16> to vector<6x16xf32>
    %64 = arith.subf %8, %63 : vector<6x16xf32>
    %65 = arith.truncf %64 : vector<6x16xf32> to vector<6x16xbf16>
    %66 = arith.extf %65 : vector<6x16xbf16> to vector<6x16xf32>
    %67 = arith.subf %64, %66 : vector<6x16xf32>
    %cst_21 = arith.constant dense<0.000000e+00> : vector<6x16xf32>
    %68 = tpu.matmul %63, %27, %cst_21 {dimension_numbers = #tpu.dot_dimension_numbers<[1], [0], [0], [1], [0, 0, 1, 1], [], []>} : vector<6x16xf32>, vector<16x16xf32>, vector<6x16xf32> -> vector<6x16xf32>
    %cst_22 = arith.constant dense<0.000000e+00> : vector<6x16xf32>
    %69 = tpu.matmul %66, %27, %cst_22 {dimension_numbers = #tpu.dot_dimension_numbers<[1], [0], [0], [1], [0, 0, 1, 1], [], []>} : vector<6x16xf32>, vector<16x16xf32>, vector<6x16xf32> -> vector<6x16xf32>
    %70 = arith.addf %68, %69 : vector<6x16xf32>
    %cst_23 = arith.constant dense<0.000000e+00> : vector<6x16xf32>
    %71 = tpu.matmul %67, %27, %cst_23 {dimension_numbers = #tpu.dot_dimension_numbers<[1], [0], [0], [1], [0, 0, 1, 1], [], []>} : vector<6x16xf32>, vector<16x16xf32>, vector<6x16xf32> -> vector<6x16xf32>
    %72 = arith.addf %70, %71 : vector<6x16xf32>
    %73 = vector.shape_cast %40 : vector<1x16xi1> to vector<1x16xi1>
    %74 = vector.broadcast %73 : vector<1x16xi1> to vector<6x16xi1>
    %75 = arith.select %74, %72, %61 : vector<6x16xi1>, vector<6x16xf32>
    %c0_24 = arith.constant 0 : index
    %76 = arith.index_cast %2 : i32 to index
    %c0_25 = arith.constant 0 : index
    %77 = vector.load %arg3[%c0_24, %76, %c0_25] : memref<1x16x16xf32, #tpu.memory_space<vmem>>, vector<1x6x16xf32>
    %78 = vector.shape_cast %77 : vector<1x6x16xf32> to vector<6x16xf32>
    %79 = vector.shape_cast %75 : vector<6x16xf32> to vector<1x6x16xf32>
    tpu.vector_store %arg3[%c0_24, %76, %c0_25], %79 {strides = array<i32>} : memref<1x16x16xf32, #tpu.memory_space<vmem>>, vector<1x6x16xf32>,
    %c6_i32_26 = arith.constant 6 : i32
    %80 = arith.addi %0, %c6_i32_26 : i32
    %c2_i32 = arith.constant 2 : i32
    %81 = arith.subi %1, %c2_i32 : i32
    %c2_i32_27 = arith.constant 2 : i32
    %82 = arith.addi %1, %c2_i32_27 : i32
    %c2_i32_28 = arith.constant 2 : i32
    %83 = arith.subi %0, %c2_i32_28 : i32
    %c2_i32_29 = arith.constant 2 : i32
    %84 = arith.addi %0, %c2_i32_29 : i32
    %c6_i32_30 = arith.constant 6 : i32
    %85 = arith.addi %1, %c6_i32_30 : i32
    %c6_i32_31 = arith.constant 6 : i32
    %86 = arith.addi %0, %c6_i32_31 : i32
    %c6_i32_32 = arith.constant 6 : i32
    %87 = arith.addi %1, %c6_i32_32 : i32
    %c2_i32_33 = arith.constant 2 : i32
    %88 = arith.subi %87, %c2_i32_33 : i32
    %c6_i32_34 = arith.constant 6 : i32
    %89 = arith.addi %1, %c6_i32_34 : i32
    %c2_i32_35 = arith.constant 2 : i32
    %90 = arith.addi %89, %c2_i32_35 : i32
    %c6_i32_36 = arith.constant 6 : i32
    %91 = arith.addi %0, %c6_i32_36 : i32
    %c2_i32_37 = arith.constant 2 : i32
    %92 = arith.subi %91, %c2_i32_37 : i32
    %c6_i32_38 = arith.constant 6 : i32
    %93 = arith.addi %0, %c6_i32_38 : i32
    %c2_i32_39 = arith.constant 2 : i32
    %94 = arith.addi %93, %c2_i32_39 : i32
    %c6_i32_40 = arith.constant 6 : i32
    %95 = arith.addi %1, %c6_i32_40 : i32
    %c6_i32_41 = arith.constant 6 : i32
    %96 = arith.addi %2, %c6_i32_41 : i32
    %c2_i32_42 = arith.constant 2 : i32
    %97 = arith.subi %3, %c2_i32_42 : i32
    %c2_i32_43 = arith.constant 2 : i32
    %98 = arith.addi %3, %c2_i32_43 : i32
    %c2_i32_44 = arith.constant 2 : i32
    %99 = arith.subi %2, %c2_i32_44 : i32
    %c2_i32_45 = arith.constant 2 : i32
    %100 = arith.addi %2, %c2_i32_45 : i32
    %c6_i32_46 = arith.constant 6 : i32
    %101 = arith.addi %3, %c6_i32_46 : i32
    %c6_i32_47 = arith.constant 6 : i32
    %102 = arith.addi %2, %c6_i32_47 : i32
    %c6_i32_48 = arith.constant 6 : i32
    %103 = arith.addi %3, %c6_i32_48 : i32
    %c2_i32_49 = arith.constant 2 : i32
    %104 = arith.subi %103, %c2_i32_49 : i32
    %c6_i32_50 = arith.constant 6 : i32
    %105 = arith.addi %3, %c6_i32_50 : i32
    %c2_i32_51 = arith.constant 2 : i32
    %106 = arith.addi %105, %c2_i32_51 : i32
    %c6_i32_52 = arith.constant 6 : i32
    %107 = arith.addi %2, %c6_i32_52 : i32
    %c2_i32_53 = arith.constant 2 : i32
    %108 = arith.subi %107, %c2_i32_53 : i32
    %c6_i32_54 = arith.constant 6 : i32
    %109 = arith.addi %2, %c6_i32_54 : i32
    %c2_i32_55 = arith.constant 2 : i32
    %110 = arith.addi %109, %c2_i32_55 : i32
    %c6_i32_56 = arith.constant 6 : i32
    %111 = arith.addi %3, %c6_i32_56 : i32
    %c0_i32 = arith.constant 0 : i32
    %112 = arith.cmpi slt, %0, %c0_i32 : i32
    %c16_i32 = arith.constant 16 : i32
    %113 = arith.addi %0, %c16_i32 : i32
    %114 = arith.select %112, %113, %0 : i32
    %c0_i32_57 = arith.constant 0 : i32
    %c16_i32_58 = arith.constant 16 : i32
    %115 = arith.maxsi %c0_i32_57, %114 : i32
    %116 = arith.minsi %c16_i32_58, %115 : i32
    %c0_i32_59 = arith.constant 0 : i32
    %117 = arith.cmpi slt, %80, %c0_i32_59 : i32
    %c16_i32_60 = arith.constant 16 : i32
    %118 = arith.addi %80, %c16_i32_60 : i32
    %119 = arith.select %117, %118, %80 : i32
    %c0_i32_61 = arith.constant 0 : i32
    %c16_i32_62 = arith.constant 16 : i32
    %120 = arith.maxsi %c0_i32_61, %119 : i32
    %121 = arith.minsi %c16_i32_62, %120 : i32
    %c0_i32_63 = arith.constant 0 : i32
    %122 = arith.cmpi slt, %81, %c0_i32_63 : i32
    %c16_i32_64 = arith.constant 16 : i32
    %123 = arith.addi %81, %c16_i32_64 : i32
    %124 = arith.select %122, %123, %81 : i32
    %c0_i32_65 = arith.constant 0 : i32
    %c16_i32_66 = arith.constant 16 : i32
    %125 = arith.maxsi %c0_i32_65, %124 : i32
    %126 = arith.minsi %c16_i32_66, %125 : i32
    %c0_i32_67 = arith.constant 0 : i32
    %127 = arith.cmpi slt, %82, %c0_i32_67 : i32
    %c16_i32_68 = arith.constant 16 : i32
    %128 = arith.addi %82, %c16_i32_68 : i32
    %129 = arith.select %127, %128, %82 : i32
    %c0_i32_69 = arith.constant 0 : i32
    %c16_i32_70 = arith.constant 16 : i32
    %130 = arith.maxsi %c0_i32_69, %129 : i32
    %131 = arith.minsi %c16_i32_70, %130 : i32
    %c0_i32_71 = arith.constant 0 : i32
    %132 = arith.cmpi slt, %83, %c0_i32_71 : i32
    %c16_i32_72 = arith.constant 16 : i32
    %133 = arith.addi %83, %c16_i32_72 : i32
    %134 = arith.select %132, %133, %83 : i32
    %c0_i32_73 = arith.constant 0 : i32
    %c16_i32_74 = arith.constant 16 : i32
    %135 = arith.maxsi %c0_i32_73, %134 : i32
    %136 = arith.minsi %c16_i32_74, %135 : i32
    %c0_i32_75 = arith.constant 0 : i32
    %137 = arith.cmpi slt, %84, %c0_i32_75 : i32
    %c16_i32_76 = arith.constant 16 : i32
    %138 = arith.addi %84, %c16_i32_76 : i32
    %139 = arith.select %137, %138, %84 : i32
    %c0_i32_77 = arith.constant 0 : i32
    %c16_i32_78 = arith.constant 16 : i32
    %140 = arith.maxsi %c0_i32_77, %139 : i32
    %141 = arith.minsi %c16_i32_78, %140 : i32
    %c0_i32_79 = arith.constant 0 : i32
    %142 = arith.cmpi slt, %1, %c0_i32_79 : i32
    %c16_i32_80 = arith.constant 16 : i32
    %143 = arith.addi %1, %c16_i32_80 : i32
    %144 = arith.select %142, %143, %1 : i32
    %c0_i32_81 = arith.constant 0 : i32
    %c16_i32_82 = arith.constant 16 : i32
    %145 = arith.maxsi %c0_i32_81, %144 : i32
    %146 = arith.minsi %c16_i32_82, %145 : i32
    %c0_i32_83 = arith.constant 0 : i32
    %147 = arith.cmpi slt, %85, %c0_i32_83 : i32
    %c16_i32_84 = arith.constant 16 : i32
    %148 = arith.addi %85, %c16_i32_84 : i32
    %149 = arith.select %147, %148, %85 : i32
    %c0_i32_85 = arith.constant 0 : i32
    %c16_i32_86 = arith.constant 16 : i32
    %150 = arith.maxsi %c0_i32_85, %149 : i32
    %151 = arith.minsi %c16_i32_86, %150 : i32
    %c0_i32_87 = arith.constant 0 : i32
    %152 = arith.cmpi slt, %0, %c0_i32_87 : i32
    %c16_i32_88 = arith.constant 16 : i32
    %153 = arith.addi %0, %c16_i32_88 : i32
    %154 = arith.select %152, %153, %0 : i32
    %c0_i32_89 = arith.constant 0 : i32
    %c16_i32_90 = arith.constant 16 : i32
    %155 = arith.maxsi %c0_i32_89, %154 : i32
    %156 = arith.minsi %c16_i32_90, %155 : i32
    %c0_i32_91 = arith.constant 0 : i32
    %157 = arith.cmpi slt, %86, %c0_i32_91 : i32
    %c16_i32_92 = arith.constant 16 : i32
    %158 = arith.addi %86, %c16_i32_92 : i32
    %159 = arith.select %157, %158, %86 : i32
    %c0_i32_93 = arith.constant 0 : i32
    %c16_i32_94 = arith.constant 16 : i32
    %160 = arith.maxsi %c0_i32_93, %159 : i32
    %161 = arith.minsi %c16_i32_94, %160 : i32
    %c0_i32_95 = arith.constant 0 : i32
    %162 = arith.cmpi slt, %88, %c0_i32_95 : i32
    %c16_i32_96 = arith.constant 16 : i32
    %163 = arith.addi %88, %c16_i32_96 : i32
    %164 = arith.select %162, %163, %88 : i32
    %c0_i32_97 = arith.constant 0 : i32
    %c16_i32_98 = arith.constant 16 : i32
    %165 = arith.maxsi %c0_i32_97, %164 : i32
    %166 = arith.minsi %c16_i32_98, %165 : i32
    %c0_i32_99 = arith.constant 0 : i32
    %167 = arith.cmpi slt, %90, %c0_i32_99 : i32
    %c16_i32_100 = arith.constant 16 : i32
    %168 = arith.addi %90, %c16_i32_100 : i32
    %169 = arith.select %167, %168, %90 : i32
    %c0_i32_101 = arith.constant 0 : i32
    %c16_i32_102 = arith.constant 16 : i32
    %170 = arith.maxsi %c0_i32_101, %169 : i32
    %171 = arith.minsi %c16_i32_102, %170 : i32
    %c0_i32_103 = arith.constant 0 : i32
    %172 = arith.cmpi slt, %92, %c0_i32_103 : i32
    %c16_i32_104 = arith.constant 16 : i32
    %173 = arith.addi %92, %c16_i32_104 : i32
    %174 = arith.select %172, %173, %92 : i32
    %c0_i32_105 = arith.constant 0 : i32
    %c16_i32_106 = arith.constant 16 : i32
    %175 = arith.maxsi %c0_i32_105, %174 : i32
    %176 = arith.minsi %c16_i32_106, %175 : i32
    %c0_i32_107 = arith.constant 0 : i32
    %177 = arith.cmpi slt, %94, %c0_i32_107 : i32
    %c16_i32_108 = arith.constant 16 : i32
    %178 = arith.addi %94, %c16_i32_108 : i32
    %179 = arith.select %177, %178, %94 : i32
    %c0_i32_109 = arith.constant 0 : i32
    %c16_i32_110 = arith.constant 16 : i32
    %180 = arith.maxsi %c0_i32_109, %179 : i32
    %181 = arith.minsi %c16_i32_110, %180 : i32
    %c0_i32_111 = arith.constant 0 : i32
    %182 = arith.cmpi slt, %1, %c0_i32_111 : i32
    %c16_i32_112 = arith.constant 16 : i32
    %183 = arith.addi %1, %c16_i32_112 : i32
    %184 = arith.select %182, %183, %1 : i32
    %c0_i32_113 = arith.constant 0 : i32
    %c16_i32_114 = arith.constant 16 : i32
    %185 = arith.maxsi %c0_i32_113, %184 : i32
    %186 = arith.minsi %c16_i32_114, %185 : i32
    %c0_i32_115 = arith.constant 0 : i32
    %187 = arith.cmpi slt, %95, %c0_i32_115 : i32
    %c16_i32_116 = arith.constant 16 : i32
    %188 = arith.addi %95, %c16_i32_116 : i32
    %189 = arith.select %187, %188, %95 : i32
    %c0_i32_117 = arith.constant 0 : i32
    %c16_i32_118 = arith.constant 16 : i32
    %190 = arith.maxsi %c0_i32_117, %189 : i32
    %191 = arith.minsi %c16_i32_118, %190 : i32
    %c0_i32_119 = arith.constant 0 : i32
    %192 = arith.cmpi slt, %2, %c0_i32_119 : i32
    %c16_i32_120 = arith.constant 16 : i32
    %193 = arith.addi %2, %c16_i32_120 : i32
    %194 = arith.select %192, %193, %2 : i32
    %c0_i32_121 = arith.constant 0 : i32
    %c16_i32_122 = arith.constant 16 : i32
    %195 = arith.maxsi %c0_i32_121, %194 : i32
    %196 = arith.minsi %c16_i32_122, %195 : i32
    %c0_i32_123 = arith.constant 0 : i32
    %197 = arith.cmpi slt, %96, %c0_i32_123 : i32
    %c16_i32_124 = arith.constant 16 : i32
    %198 = arith.addi %96, %c16_i32_124 : i32
    %199 = arith.select %197, %198, %96 : i32
    %c0_i32_125 = arith.constant 0 : i32
    %c16_i32_126 = arith.constant 16 : i32
    %200 = arith.maxsi %c0_i32_125, %199 : i32
    %201 = arith.minsi %c16_i32_126, %200 : i32
    %c0_i32_127 = arith.constant 0 : i32
    %202 = arith.cmpi slt, %97, %c0_i32_127 : i32
    %c16_i32_128 = arith.constant 16 : i32
    %203 = arith.addi %97, %c16_i32_128 : i32
    %204 = arith.select %202, %203, %97 : i32
    %c0_i32_129 = arith.constant 0 : i32
    %c16_i32_130 = arith.constant 16 : i32
    %205 = arith.maxsi %c0_i32_129, %204 : i32
    %206 = arith.minsi %c16_i32_130, %205 : i32
    %c0_i32_131 = arith.constant 0 : i32
    %207 = arith.cmpi slt, %98, %c0_i32_131 : i32
    %c16_i32_132 = arith.constant 16 : i32
    %208 = arith.addi %98, %c16_i32_132 : i32
    %209 = arith.select %207, %208, %98 : i32
    %c0_i32_133 = arith.constant 0 : i32
    %c16_i32_134 = arith.constant 16 : i32
    %210 = arith.maxsi %c0_i32_133, %209 : i32
    %211 = arith.minsi %c16_i32_134, %210 : i32
    %c0_i32_135 = arith.constant 0 : i32
    %212 = arith.cmpi slt, %99, %c0_i32_135 : i32
    %c16_i32_136 = arith.constant 16 : i32
    %213 = arith.addi %99, %c16_i32_136 : i32
    %214 = arith.select %212, %213, %99 : i32
    %c0_i32_137 = arith.constant 0 : i32
    %c16_i32_138 = arith.constant 16 : i32
    %215 = arith.maxsi %c0_i32_137, %214 : i32
    %216 = arith.minsi %c16_i32_138, %215 : i32
    %c0_i32_139 = arith.constant 0 : i32
    %217 = arith.cmpi slt, %100, %c0_i32_139 : i32
    %c16_i32_140 = arith.constant 16 : i32
    %218 = arith.addi %100, %c16_i32_140 : i32
    %219 = arith.select %217, %218, %100 : i32
    %c0_i32_141 = arith.constant 0 : i32
    %c16_i32_142 = arith.constant 16 : i32
    %220 = arith.maxsi %c0_i32_141, %219 : i32
    %221 = arith.minsi %c16_i32_142, %220 : i32
    %c0_i32_143 = arith.constant 0 : i32
    %222 = arith.cmpi slt, %3, %c0_i32_143 : i32
    %c16_i32_144 = arith.constant 16 : i32
    %223 = arith.addi %3, %c16_i32_144 : i32
    %224 = arith.select %222, %223, %3 : i32
    %c0_i32_145 = arith.constant 0 : i32
    %c16_i32_146 = arith.constant 16 : i32
    %225 = arith.maxsi %c0_i32_145, %224 : i32
    %226 = arith.minsi %c16_i32_146, %225 : i32
    %c0_i32_147 = arith.constant 0 : i32
    %227 = arith.cmpi slt, %101, %c0_i32_147 : i32
    %c16_i32_148 = arith.constant 16 : i32
    %228 = arith.addi %101, %c16_i32_148 : i32
    %229 = arith.select %227, %228, %101 : i32
    %c0_i32_149 = arith.constant 0 : i32
    %c16_i32_150 = arith.constant 16 : i32
    %230 = arith.maxsi %c0_i32_149, %229 : i32
    %231 = arith.minsi %c16_i32_150, %230 : i32
    %c0_i32_151 = arith.constant 0 : i32
    %232 = arith.cmpi slt, %2, %c0_i32_151 : i32
    %c16_i32_152 = arith.constant 16 : i32
    %233 = arith.addi %2, %c16_i32_152 : i32
    %234 = arith.select %232, %233, %2 : i32
    %c0_i32_153 = arith.constant 0 : i32
    %c16_i32_154 = arith.constant 16 : i32
    %235 = arith.maxsi %c0_i32_153, %234 : i32
    %236 = arith.minsi %c16_i32_154, %235 : i32
    %c0_i32_155 = arith.constant 0 : i32
    %237 = arith.cmpi slt, %102, %c0_i32_155 : i32
    %c16_i32_156 = arith.constant 16 : i32
    %238 = arith.addi %102, %c16_i32_156 : i32
    %239 = arith.select %237, %238, %102 : i32
    %c0_i32_157 = arith.constant 0 : i32
    %c16_i32_158 = arith.constant 16 : i32
    %240 = arith.maxsi %c0_i32_157, %239 : i32
    %241 = arith.minsi %c16_i32_158, %240 : i32
    %c0_i32_159 = arith.constant 0 : i32
    %242 = arith.cmpi slt, %104, %c0_i32_159 : i32
    %c16_i32_160 = arith.constant 16 : i32
    %243 = arith.addi %104, %c16_i32_160 : i32
    %244 = arith.select %242, %243, %104 : i32
    %c0_i32_161 = arith.constant 0 : i32
    %c16_i32_162 = arith.constant 16 : i32
    %245 = arith.maxsi %c0_i32_161, %244 : i32
    %246 = arith.minsi %c16_i32_162, %245 : i32
    %c0_i32_163 = arith.constant 0 : i32
    %247 = arith.cmpi slt, %106, %c0_i32_163 : i32
    %c16_i32_164 = arith.constant 16 : i32
    %248 = arith.addi %106, %c16_i32_164 : i32
    %249 = arith.select %247, %248, %106 : i32
    %c0_i32_165 = arith.constant 0 : i32
    %c16_i32_166 = arith.constant 16 : i32
    %250 = arith.maxsi %c0_i32_165, %249 : i32
    %251 = arith.minsi %c16_i32_166, %250 : i32
    %c0_i32_167 = arith.constant 0 : i32
    %252 = arith.cmpi slt, %108, %c0_i32_167 : i32
    %c16_i32_168 = arith.constant 16 : i32
    %253 = arith.addi %108, %c16_i32_168 : i32
    %254 = arith.select %252, %253, %108 : i32
    %c0_i32_169 = arith.constant 0 : i32
    %c16_i32_170 = arith.constant 16 : i32
    %255 = arith.maxsi %c0_i32_169, %254 : i32
    %256 = arith.minsi %c16_i32_170, %255 : i32
    %c0_i32_171 = arith.constant 0 : i32
    %257 = arith.cmpi slt, %110, %c0_i32_171 : i32
    %c16_i32_172 = arith.constant 16 : i32
    %258 = arith.addi %110, %c16_i32_172 : i32
    %259 = arith.select %257, %258, %110 : i32
    %c0_i32_173 = arith.constant 0 : i32
    %c16_i32_174 = arith.constant 16 : i32
    %260 = arith.maxsi %c0_i32_173, %259 : i32
    %261 = arith.minsi %c16_i32_174, %260 : i32
    %c0_i32_175 = arith.constant 0 : i32
    %262 = arith.cmpi slt, %3, %c0_i32_175 : i32
    %c16_i32_176 = arith.constant 16 : i32
    %263 = arith.addi %3, %c16_i32_176 : i32
    %264 = arith.select %262, %263, %3 : i32
    %c0_i32_177 = arith.constant 0 : i32
    %c16_i32_178 = arith.constant 16 : i32
    %265 = arith.maxsi %c0_i32_177, %264 : i32
    %266 = arith.minsi %c16_i32_178, %265 : i32
    %c0_i32_179 = arith.constant 0 : i32
    %267 = arith.cmpi slt, %111, %c0_i32_179 : i32
    %c16_i32_180 = arith.constant 16 : i32
    %268 = arith.addi %111, %c16_i32_180 : i32
    %269 = arith.select %267, %268, %111 : i32
    %c0_i32_181 = arith.constant 0 : i32
    %c16_i32_182 = arith.constant 16 : i32
    %270 = arith.maxsi %c0_i32_181, %269 : i32
    %271 = arith.minsi %c16_i32_182, %270 : i32
    %272 = tpu.iota {dimensions = array<i32: 0>} : vector<16x16xi32>
    %273 = tpu.iota {dimensions = array<i32: 1>} : vector<16x16xi32>
    %274 = vector.broadcast %116 : i32 to vector<16x16xi32>
    %275 = arith.cmpi sge, %272, %274 : vector<16x16xi32>
    %276 = vector.broadcast %121 : i32 to vector<16x16xi32>
    %277 = arith.cmpi slt, %272, %276 : vector<16x16xi32>
    %278 = arith.andi %275, %277 : vector<16x16xi1>
    %279 = vector.broadcast %126 : i32 to vector<16x16xi32>
    %280 = arith.cmpi sge, %273, %279 : vector<16x16xi32>
    %281 = arith.andi %278, %280 : vector<16x16xi1>
    %282 = vector.broadcast %131 : i32 to vector<16x16xi32>
    %283 = arith.cmpi slt, %273, %282 : vector<16x16xi32>
    %284 = arith.andi %281, %283 : vector<16x16xi1>
    %285 = vector.broadcast %136 : i32 to vector<16x16xi32>
    %286 = arith.cmpi sge, %272, %285 : vector<16x16xi32>
    %287 = vector.broadcast %141 : i32 to vector<16x16xi32>
    %288 = arith.cmpi slt, %272, %287 : vector<16x16xi32>
    %289 = arith.andi %286, %288 : vector<16x16xi1>
    %290 = vector.broadcast %146 : i32 to vector<16x16xi32>
    %291 = arith.cmpi sge, %273, %290 : vector<16x16xi32>
    %292 = arith.andi %289, %291 : vector<16x16xi1>
    %293 = vector.broadcast %151 : i32 to vector<16x16xi32>
    %294 = arith.cmpi slt, %273, %293 : vector<16x16xi32>
    %295 = arith.andi %292, %294 : vector<16x16xi1>
    %296 = arith.ori %284, %295 : vector<16x16xi1>
    %297 = vector.broadcast %156 : i32 to vector<16x16xi32>
    %298 = arith.cmpi sge, %272, %297 : vector<16x16xi32>
    %299 = vector.broadcast %161 : i32 to vector<16x16xi32>
    %300 = arith.cmpi slt, %272, %299 : vector<16x16xi32>
    %301 = arith.andi %298, %300 : vector<16x16xi1>
    %302 = vector.broadcast %166 : i32 to vector<16x16xi32>
    %303 = arith.cmpi sge, %273, %302 : vector<16x16xi32>
    %304 = arith.andi %301, %303 : vector<16x16xi1>
    %305 = vector.broadcast %171 : i32 to vector<16x16xi32>
    %306 = arith.cmpi slt, %273, %305 : vector<16x16xi32>
    %307 = arith.andi %304, %306 : vector<16x16xi1>
    %308 = arith.ori %296, %307 : vector<16x16xi1>
    %309 = vector.broadcast %176 : i32 to vector<16x16xi32>
    %310 = arith.cmpi sge, %272, %309 : vector<16x16xi32>
    %311 = vector.broadcast %181 : i32 to vector<16x16xi32>
    %312 = arith.cmpi slt, %272, %311 : vector<16x16xi32>
    %313 = arith.andi %310, %312 : vector<16x16xi1>
    %314 = vector.broadcast %186 : i32 to vector<16x16xi32>
    %315 = arith.cmpi sge, %273, %314 : vector<16x16xi32>
    %316 = arith.andi %313, %315 : vector<16x16xi1>
    %317 = vector.broadcast %191 : i32 to vector<16x16xi32>
    %318 = arith.cmpi slt, %273, %317 : vector<16x16xi32>
    %319 = arith.andi %316, %318 : vector<16x16xi1>
    %320 = arith.ori %308, %319 : vector<16x16xi1>
    %321 = vector.broadcast %196 : i32 to vector<16x16xi32>
    %322 = arith.cmpi sge, %272, %321 : vector<16x16xi32>
    %323 = vector.broadcast %201 : i32 to vector<16x16xi32>
    %324 = arith.cmpi slt, %272, %323 : vector<16x16xi32>
    %325 = arith.andi %322, %324 : vector<16x16xi1>
    %326 = vector.broadcast %206 : i32 to vector<16x16xi32>
    %327 = arith.cmpi sge, %273, %326 : vector<16x16xi32>
    %328 = arith.andi %325, %327 : vector<16x16xi1>
    %329 = vector.broadcast %211 : i32 to vector<16x16xi32>
    %330 = arith.cmpi slt, %273, %329 : vector<16x16xi32>
    %331 = arith.andi %328, %330 : vector<16x16xi1>
    %332 = arith.ori %320, %331 : vector<16x16xi1>
    %333 = vector.broadcast %216 : i32 to vector<16x16xi32>
    %334 = arith.cmpi sge, %272, %333 : vector<16x16xi32>
    %335 = vector.broadcast %221 : i32 to vector<16x16xi32>
    %336 = arith.cmpi slt, %272, %335 : vector<16x16xi32>
    %337 = arith.andi %334, %336 : vector<16x16xi1>
    %338 = vector.broadcast %226 : i32 to vector<16x16xi32>
    %339 = arith.cmpi sge, %273, %338 : vector<16x16xi32>
    %340 = arith.andi %337, %339 : vector<16x16xi1>
    %341 = vector.broadcast %231 : i32 to vector<16x16xi32>
    %342 = arith.cmpi slt, %273, %341 : vector<16x16xi32>
    %343 = arith.andi %340, %342 : vector<16x16xi1>
    %344 = arith.ori %332, %343 : vector<16x16xi1>
    %345 = vector.broadcast %236 : i32 to vector<16x16xi32>
    %346 = arith.cmpi sge, %272, %345 : vector<16x16xi32>
    %347 = vector.broadcast %241 : i32 to vector<16x16xi32>
    %348 = arith.cmpi slt, %272, %347 : vector<16x16xi32>
    %349 = arith.andi %346, %348 : vector<16x16xi1>
    %350 = vector.broadcast %246 : i32 to vector<16x16xi32>
    %351 = arith.cmpi sge, %273, %350 : vector<16x16xi32>
    %352 = arith.andi %349, %351 : vector<16x16xi1>
    %353 = vector.broadcast %251 : i32 to vector<16x16xi32>
    %354 = arith.cmpi slt, %273, %353 : vector<16x16xi32>
    %355 = arith.andi %352, %354 : vector<16x16xi1>
    %356 = arith.ori %344, %355 : vector<16x16xi1>
    %357 = vector.broadcast %256 : i32 to vector<16x16xi32>
    %358 = arith.cmpi sge, %272, %357 : vector<16x16xi32>
    %359 = vector.broadcast %261 : i32 to vector<16x16xi32>
    %360 = arith.cmpi slt, %272, %359 : vector<16x16xi32>
    %361 = arith.andi %358, %360 : vector<16x16xi1>
    %362 = vector.broadcast %266 : i32 to vector<16x16xi32>
    %363 = arith.cmpi sge, %273, %362 : vector<16x16xi32>
    %364 = arith.andi %361, %363 : vector<16x16xi1>
    %365 = vector.broadcast %271 : i32 to vector<16x16xi32>
    %366 = arith.cmpi slt, %273, %365 : vector<16x16xi32>
    %367 = arith.andi %364, %366 : vector<16x16xi1>
    %368 = arith.ori %356, %367 : vector<16x16xi1>
    %cst_183 = arith.constant 0.000000e+00 : f32
    %cst_184 = arith.constant 1.000000e+00 : f32
    %369 = vector.broadcast %cst_183 : f32 to vector<16x16xf32>
    %370 = vector.broadcast %cst_184 : f32 to vector<16x16xf32>
    %371 = arith.select %368, %369, %370 : vector<16x16xi1>, vector<16x16xf32>
    %c0_185 = arith.constant 0 : index
    %c0_186 = arith.constant 0 : index
    %c0_187 = arith.constant 0 : index
    %372 = vector.load %arg4[%c0_185, %c0_186, %c0_187] : memref<1x16x16xf32, #tpu.memory_space<vmem>>, vector<1x16x16xf32>
    %373 = vector.shape_cast %372 : vector<1x16x16xf32> to vector<16x16xf32>
    %374 = vector.shape_cast %371 : vector<16x16xf32> to vector<1x16x16xf32>
    tpu.vector_store %arg4[%c0_185, %c0_186, %c0_187], %374 {strides = array<i32>} : memref<1x16x16xf32, #tpu.memory_space<vmem>>, vector<1x16x16xf32>,
    return
  }
  func.func @transform_0(%arg0: i32) -> i32 {
    %c0_i32 = arith.constant 0 : i32
    %c0_i32_0 = arith.constant 0 : i32
    return %c0_i32 : i32
  }
  func.func @transform_1(%arg0: i32) -> (i32, i32, i32) {
    %c0_i32 = arith.constant 0 : i32
    %c0_i32_0 = arith.constant 0 : i32
    %c0_i32_1 = arith.constant 0 : i32
    return %arg0, %c0_i32, %c0_i32_0 : i32, i32, i32
  }
  func.func @transform_2(%arg0: i32) -> (i32, i32, i32) {
    %c0_i32 = arith.constant 0 : i32
    %c0_i32_0 = arith.constant 0 : i32
    %c0_i32_1 = arith.constant 0 : i32
    return %arg0, %c0_i32, %c0_i32_0 : i32, i32, i32
  }
  func.func @transform_3(%arg0: i32) -> (i32, i32, i32) {
    %c0_i32 = arith.constant 0 : i32
    %c0_i32_0 = arith.constant 0 : i32
    %c0_i32_1 = arith.constant 0 : i32
    return %arg0, %c0_i32, %c0_i32_0 : i32, i32, i32
  }
}

</mosaic_0001>

<llo_original>
// kernel: tpu_custom_call.1
$region0: #{tpu_custom_call.1}
  #allocation0 [shape = 'u32[]', space=smem, size = 0x4, offset = 0x4, fixed_abs, tag = 'smem constant byte address 0x4 - core index']
  #allocation1 [shape = 'u32[144,128]{1,0:T(1,128)}', space=vmem, size = 0x12000, scoped, tag = 'internal scratch']
  %s0 = inlined_call_operand.hbm [shape: s32[4], index: 0, kind: input, shape index: {}]
  %s1 = inlined_call_operand.hbm [shape: f32[8,16,16], index: 1, kind: input, shape index: {}]
  %s2 = inlined_call_operand.hbm [shape: f32[8,16,16], index: 2, kind: output, shape index: {0}]
  %s3 = inlined_call_operand.hbm [shape: f32[8,16,16], index: 3, kind: output, shape index: {1}]
  %4 = xla_tuple %s2, %s3
  %s5 = sld [smem:[#allocation0]]
  $region57: #{tpu_custom_call.1} parent=0
    _
  %s7 = ssub.s32 1, %s5
  %s8 = scalar_select 0, %s7, %s5
  $region1: #{tpu_custom_call.1} parent=0
    #allocation2 [shape = 'u8[512]{0}', space=smem, size = 0x200, scoped, tag = 'input window, operand 0, single buffered']
    #allocation3 [shape = 's32[2]{0}', space=sflag, size = 0x8, scoped, tag = 'scoped memory for tpu_custom_call.1']
    #allocation4 [shape = 's32[2]{0}', space=sflag, size = 0x8, scoped, tag = 'scoped memory for tpu_custom_call.1']
    #allocation5 [shape = 's32[2]{0}', space=sflag, size = 0x8, scoped, tag = 'scoped memory for tpu_custom_call.1']
    #allocation6 [shape = 'u8[16384]{0}', space=vmem, size = 0x4000, scoped, tag = 'input window, operand 1']
    #allocation7 [shape = 'u8[16384]{0}', space=vmem, size = 0x4000, scoped, tag = 'output window, operand 0']
    #allocation8 [shape = 'u8[16384]{0}', space=vmem, size = 0x4000, scoped, tag = 'output window, operand 1']
    #allocation9 [shape = 's32[2]{0}', space=sflag, size = 0x8, scoped, tag = 'scoped memory for tpu_custom_call.1']
    %9 = vsyncpa [#allocation5], 0
    %10 = vsyncpa [#allocation3], 0
    %s11 = scalar_lea.sflag [#allocation3], 1
    %12 = vsyncpa %s11, 0
    %13 = vsyncpa [#allocation4], 0
    %s14 = scalar_lea.sflag [#allocation4], 1
    %15 = vsyncpa %s14, 0
    %16 = vsyncpa [#allocation9], 0
    %s17 = scalar_lea.sflag [#allocation9], 1
    %18 = vsyncpa %s17, 0
    loop: start=0, step=1, limit=10
    $region2: #{tpu_custom_call.1} parent=1 // loop_pre_header
      _
    $region3: #{tpu_custom_call.1} parent=1 // loop_header
      %s20 = sphi 0, %s24
      %p21 = scmp.ge.s32.totalorder %s20, 10
      %s28 = sphi 0, %s28
      %s30 = sphi 0, %s28
      %s31 = sphi 0, %s30
      %s45 = sphi 0, %s31
      %s51 = sphi 0, %s53
      %s54 = sphi 0, %s51
      %s55 = sphi 0, %s54
      %s71 = sphi 0, %s55
      %s77 = sphi 0, %s79
      %s80 = sphi 0, %s77
      %s81 = sphi 0, %s80
      %s97 = sphi 0, %s81
      %s103 = sphi 0, %s105
      %s106 = sphi 0, %s103
      %s107 = sphi 0, %s106
      %s123 = sphi 0, %s107
    $region4: #{tpu_custom_call.1} parent=1 // loop_header_branch
      %23 = sbr.rel (%p21) target = $region8
    $region5: #{tpu_custom_call.1} parent=1 // loop_body
      %s25 = ssub.s32 %s20, 1
      %s26 = ssub.s32 %s20, 2
      %s27 = sadd.s32 %s20, 1
      %s29 = sadd.s32 %s28, 1
      %p32 = scmp.eq.s32.totalorder %s20, 7
      %p33 = scmp.ne.s32.totalorder %s28, %s30
      %p34 = scmp.eq.s32.totalorder %s20, 0
      %p35 = por %p33, %p34
      %p36 = scmp.ne.s32.totalorder %s28, %s30
      %p37 = scmp.eq.s32.totalorder %s25, 7
      %p38 = por %p36, %p37
      %p39 = scmp.ne.s32.totalorder %s30, %s31
      %p40 = scmp.eq.s32.totalorder %s25, 0
      %p41 = por %p39, %p40
      %p42 = scmp.ne.s32.totalorder %s30, %s31
      %p43 = scmp.eq.s32.totalorder %s26, 7
      %p44 = por %p42, %p43
      %p46 = scmp.ne.s32.totalorder %s31, %s45
      %p47 = scmp.eq.s32.totalorder %s26, 0
      %p48 = por %p46, %p47
      %s49 = ssub.s32 %s20, %s27
      %p50 = scmp.eq.s32.totalorder %s49, 0
      %s52 = sadd.s32 %s51, 1
      %s53 = scalar_select %p50, %s51, %s52
      %p56 = pneg %p50
      %p57 = scmp.eq.s32.totalorder %s20, 7
      %p58 = por %p56, %p57
      %p59 = scmp.ne.s32.totalorder %s51, %s54
      %p60 = scmp.eq.s32.totalorder %s20, 0
      %p61 = por %p59, %p60
      %p62 = scmp.ne.s32.totalorder %s51, %s54
      %p63 = scmp.eq.s32.totalorder %s25, 7
      %p64 = por %p62, %p63
      %p65 = scmp.ne.s32.totalorder %s54, %s55
      %p66 = scmp.eq.s32.totalorder %s25, 0
      %p67 = por %p65, %p66
      %p68 = scmp.ne.s32.totalorder %s54, %s55
      %p69 = scmp.eq.s32.totalorder %s26, 7
      %p70 = por %p68, %p69
      %p72 = scmp.ne.s32.totalorder %s55, %s71
      %p73 = scmp.eq.s32.totalorder %s26, 0
      %p74 = por %p72, %p73
      %s75 = ssub.s32 %s20, %s27
      %p76 = scmp.eq.s32.totalorder %s75, 0
      %s78 = sadd.s32 %s77, 1
      %s79 = scalar_select %p76, %s77, %s78
      %p82 = pneg %p76
      %p83 = scmp.eq.s32.totalorder %s20, 7
      %p84 = por %p82, %p83
      %p85 = scmp.ne.s32.totalorder %s77, %s80
      %p86 = scmp.eq.s32.totalorder %s20, 0
      %p87 = por %p85, %p86
      %p88 = scmp.ne.s32.totalorder %s77, %s80
      %p89 = scmp.eq.s32.totalorder %s25, 7
      %p90 = por %p88, %p89
      %p91 = scmp.ne.s32.totalorder %s80, %s81
      %p92 = scmp.eq.s32.totalorder %s25, 0
      %p93 = por %p91, %p92
      %p94 = scmp.ne.s32.totalorder %s80, %s81
      %p95 = scmp.eq.s32.totalorder %s26, 7
      %p96 = por %p94, %p95
      %p98 = scmp.ne.s32.totalorder %s81, %s97
      %p99 = scmp.eq.s32.totalorder %s26, 0
      %p100 = por %p98, %p99
      %s101 = ssub.s32 %s20, %s27
      %p102 = scmp.eq.s32.totalorder %s101, 0
      %s104 = sadd.s32 %s103, 1
      %s105 = scalar_select %p102, %s103, %s104
      %p108 = pneg %p102
      %p109 = scmp.eq.s32.totalorder %s20, 7
      %p110 = por %p108, %p109
      %p111 = scmp.ne.s32.totalorder %s103, %s106
      %p112 = scmp.eq.s32.totalorder %s20, 0
      %p113 = por %p111, %p112
      %p114 = scmp.ne.s32.totalorder %s103, %s106
      %p115 = scmp.eq.s32.totalorder %s25, 7
      %p116 = por %p114, %p115
      %p117 = scmp.ne.s32.totalorder %s106, %s107
      %p118 = scmp.eq.s32.totalorder %s25, 0
      %p119 = por %p117, %p118
      %p120 = scmp.ne.s32.totalorder %s106, %s107
      %p121 = scmp.eq.s32.totalorder %s26, 7
      %p122 = por %p120, %p121
      %p124 = scmp.ne.s32.totalorder %s107, %s123
      %p125 = scmp.eq.s32.totalorder %s26, 0
      %p126 = por %p124, %p125
      %p127 = scmp.le.s32.totalorder 1, %s20
      %p128 = scmp.lt.s32.totalorder %s20, 9
      %p129 = pnand %p127, %p128
      %p130 = pneg %p129
      // Predicated region
      $region9: #{tpu_custom_call.1} parent=5 // pred_check
        _
      $region10: #{tpu_custom_call.1} parent=5 // pred_check_branch
        %132 = sbr.rel (%p129) target = $region12
      $region11: #{tpu_custom_call.1} parent=5 // pred_region
        %s133 = ssub.s32 %s20, 1
        // Predicated region
        $region13: #{tpu_custom_call.1} parent=11 // pred_check
          %p134 = pneg %p41
        $region14: #{tpu_custom_call.1} parent=11 // pred_check_branch
          %136 = sbr.rel (%p134) target = $region16
        $region15: #{tpu_custom_call.1} parent=11 // pred_region
          %s138 = ssub.s32 16, 16
          %139 = vsyncadd [#allocation5], %s138
          %142 = dma.hbm_to_smem %s0, 16, [#allocation2], [#allocation5]
        $region16: #{tpu_custom_call.1} parent=11 // pred_fallthru
          _
      $region12: #{tpu_custom_call.1} parent=5 // pred_fallthru
        _
      %p143 = scmp.lt.s32.totalorder %s20, 8
      // Predicated region
      $region17: #{tpu_custom_call.1} parent=5 // pred_check
        %p144 = pneg %p143
      $region18: #{tpu_custom_call.1} parent=5 // pred_check_branch
        %146 = sbr.rel (%p144) target = $region20
      $region19: #{tpu_custom_call.1} parent=5 // pred_region
        // Predicated region
        $region21: #{tpu_custom_call.1} parent=19 // pred_check
          %p147 = pneg %p61
        $region22: #{tpu_custom_call.1} parent=19 // pred_check_branch
          %149 = sbr.rel (%p147) target = $region24
        $region23: #{tpu_custom_call.1} parent=19 // pred_region
          %s150 = sand.u32 %s51, 1
          %s151 = scalar_lea.sflag [#allocation3], %s150
          %s152 = sand.u32 %s51, 1
          %s153 = smul.addr %s152, 16
          %s154 = scalar_lea.vmem [#allocation6], %s153
          %s156 = ssub.s32 256, 256
          %157 = vsyncadd %s151, %s156
          %s158 = smul.addr %s20, 2
          %s159 = smul.addr %s158, 128
          %s160 = scalar_lea.hbm %s1, %s159
          %s161 = sshll.u32 %s154, 4
          %s162 = int_to_ptr.vmem [resolvable:$true] %s161
          %167 = dma.hbm_to_vmem [thread:$0]  %s160, 256, %s162, %s151, 128, 128, 8
        $region24: #{tpu_custom_call.1} parent=19 // pred_fallthru
          _
      $region20: #{tpu_custom_call.1} parent=5 // pred_fallthru
        _
      %p168 = scmp.le.s32.totalorder 1, %s20
      %p169 = scmp.lt.s32.totalorder %s20, 9
      %p170 = pnand %p168, %p169
      %p171 = pneg %p170
      // Predicated region
      $region25: #{tpu_custom_call.1} parent=5 // pred_check
        _
      $region26: #{tpu_custom_call.1} parent=5 // pred_check_branch
        %173 = sbr.rel (%p170) target = $region28
      $region27: #{tpu_custom_call.1} parent=5 // pred_region
        %s174 = ssub.s32 %s20, 1
        // Predicated region
        $region29: #{tpu_custom_call.1} parent=27 // pred_check
          %p175 = pneg %p41
        $region30: #{tpu_custom_call.1} parent=27 // pred_check_branch
          %177 = sbr.rel (%p175) target = $region32
        $region31: #{tpu_custom_call.1} parent=27 // pred_region
          %178 = dma.done [#allocation5], 16
        $region32: #{tpu_custom_call.1} parent=27 // pred_fallthru
          _
        %s179 = sand.u32 %s54, 1
        %s180 = scalar_lea.sflag [#allocation3], %s179
        %s181 = sand.u32 %s54, 1
        %s182 = smul.addr %s181, 16
        %s183 = scalar_lea.vmem [#allocation6], %s182
        // Predicated region
        $region33: #{tpu_custom_call.1} parent=27 // pred_check
          %p184 = pneg %p67
        $region34: #{tpu_custom_call.1} parent=27 // pred_check_branch
          %186 = sbr.rel (%p184) target = $region36
        $region35: #{tpu_custom_call.1} parent=27 // pred_region
          %187 = dma.done %s180, 256
        $region36: #{tpu_custom_call.1} parent=27 // pred_fallthru
          _
        %188 = sfence
        %p189 = pneg %p41
        %p190 = pneg %p38
        %s191 = sand.u32 %s54, 1
        %s192 = scalar_lea.sflag [#allocation3], %s191
        %s193 = sand.u32 %s54, 1
        %s194 = smul.addr %s193, 16
        %s195 = scalar_lea.vmem [#allocation6], %s194
        %p196 = pneg %p67
        %p197 = pneg %p64
        %p198 = pneg %p93
        %p199 = pneg %p90
        %s200 = sand.u32 %s80, 1
        %s201 = scalar_lea.sflag [#allocation4], %s200
        %s202 = sand.u32 %s80, 1
        %s203 = smul.addr %s202, 16
        %s204 = scalar_lea.vmem [#allocation7], %s203
        %p205 = pneg %p119
        %p206 = pneg %p116
        %s207 = sand.u32 %s106, 1
        %s208 = scalar_lea.sflag [#allocation9], %s207
        %s209 = sand.u32 %s106, 1
        %s210 = smul.addr %s209, 16
        %s211 = scalar_lea.vmem [#allocation8], %s210
        %s212 = sld [smem:[#allocation2]]
        %s213 = sld [smem:[#allocation2 + $0x1]]
        %s214 = sld [smem:[#allocation2 + $0x2]]
        %s215 = sld [smem:[#allocation2 + $0x3]]
        %v216 = vld [vmem:[%s183] sm:$0xff]
        %v217 = vld [vmem:[%s183 + $0x8] sm:$0xff]
        %vm218 = vcmask 130048
        %219 = vst.msk [vmem:[%s204] sm:$0xff] %vm218, %v216
        %220 = vst.msk [vmem:[%s204 + $0x8] sm:$0xff] %vm218, %v217
        %s221 = scalar_lea.vmem %s183, %s212 [#allocation6]
        %v222 = vld [vmem:[%s221] sm:$0x3f]
        %s223 = scalar_lea.vmem %s183, %s214 [#allocation6]
        %v224 = vld [vmem:[%s223] sm:$0x3f]
        %v225 = vlaneseq
        %v226 = vshrl.u32 %v225, 7
        %v227 = vadd.s32 %v226, 8
        %v228 = vlaneseq
        %v229 = vand.u32 %v228, 127
        %v230 = vsub.s32 %v226, %v229
        %v231 = vsub.s32 %v227, %v229
        %s232 = ssub.s32 %s215, %s213
        %v233 = vstv %s232
        %vm234 = vcmp.eq.s32.totalorder %v230, %v233
        %vm235 = vcmp.eq.s32.totalorder %v231, %v233
        %v236 = vsel %vm234, 1.0, 0.0
        %v237 = vsel %vm235, 1.0, 0.0
        %s238 = ssub.s32 %s213, %s215
        %v239 = vstv %s238
        %vm240 = vcmp.eq.s32.totalorder %v230, %v239
        %vm241 = vcmp.eq.s32.totalorder %v231, %v239
        %v242 = vsel %vm240, 1.0, 0.0
        %v243 = vsel %vm241, 1.0, 0.0
        %v244 = vstv %s213
        %vm245 = vcmp.ge.s32.totalorder %v229, %v244
        %s246 = sadd.s32 %s213, 6
        %v247 = vstv %s246
        %vm248 = vcmp.lt.s32.totalorder %v229, %v247
        %vm249 = vmand %vm245, %vm248
        %v250 = vstv %s215
        %vm251 = vcmp.ge.s32.totalorder %v229, %v250
        %s252 = sadd.s32 %s215, 6
        %v253 = vstv %s252
        %vm254 = vcmp.lt.s32.totalorder %v229, %v253
        %vm255 = vmand %vm251, %vm254
        %v256 = vpack.c.bf16 %v224, %v224
        %v257 = vunpack.c.l.bf16 %v256
        %v258 = vsub.f32 %v224, %v257
        %v259 = vpack.c.bf16 %v258, %v258
        %v260 = vunpack.c.l.bf16 %v259
        %v261 = vsub.f32 %v258, %v260
        %v263 = vsel %vm218, %v260, 0
        %265 = vmatprep.subr.mxu0 0.0
        %266 = vmatpush1.msra.mxu0 %v236
        %267 = vmatprep.subr.mxu0 0.0
        %268 = vmatpush1.msra.mxu0 %v237
        %269 = vmatprep.subr.mxu0 0.0
        %270 = vmatpush1.msra.mxu0 0.0
        %271 = vmatprep.subr.mxu0 0.0
        %272 = vmatpush1.msra.mxu0 0.0
        %273 = vmatprep.subr.mxu0 0.0
        %274 = vmatpush1.msra.mxu0 0.0
        %275 = vmatprep.subr.mxu0 0.0
        %276 = vmatpush1.msra.mxu0 0.0
        %277 = vmatprep.subr.mxu0 0.0
        %278 = vmatpush1.msra.mxu0 0.0
        %279 = vmatprep.subr.mxu0 0.0
        %280 = vmatpush1.msra.mxu0 0.0
        %281 = vmatprep.subr.mxu0 0.0
        %282 = vmatpush1.msra.mxu0 0.0
        %283 = vmatprep.subr.mxu0 0.0
        %284 = vmatpush1.msra.mxu0 0.0
        %285 = vmatprep.subr.mxu0 0.0
        %286 = vmatpush1.msra.mxu0 0.0
        %287 = vmatprep.subr.mxu0 0.0
        %288 = vmatpush1.msra.mxu0 0.0
        %289 = vmatprep.subr.mxu0 0.0
        %290 = vmatpush1.msra.mxu0 0.0
        %291 = vmatprep.subr.mxu0 0.0
        %292 = vmatpush1.msra.mxu0 0.0
        %293 = vmatprep.subr.mxu0 0.0
        %294 = vmatpush1.msra.mxu0 0.0
        %295 = vmatprep.subr.mxu0 0.0
        %296 = vmatpush1.msra.mxu0 0.0
        %297 = vmatprep.subr.mxu0 0.0
        %298 = vmatpush1.msra.mxu0 0.0
        %299 = vmatprep.subr.mxu0 0.0
        %300 = vmatpush1.msra.mxu0 0.0
        %301 = vmatprep.subr.mxu0 0.0
        %302 = vmatpush1.msra.mxu0 0.0
        %303 = vmatprep.subr.mxu0 0.0
        %304 = vmatpush1.msra.mxu0 0.0
        %305 = vmatprep.subr.mxu0 0.0
        %306 = vmatpush1.msra.mxu0 0.0
        %307 = vmatprep.subr.mxu0 0.0
        %308 = vmatpush1.msra.mxu0 0.0
        %309 = vmatprep.subr.mxu0 0.0
        %310 = vmatpush1.msra.mxu0 0.0
        %311 = vmatprep.subr.mxu0 0.0
        %312 = vmatpush1.msra.mxu0 0.0
        %313 = vmatprep.subr.mxu0 0.0
        %314 = vmatpush1.msra.mxu0 0.0
        %315 = vmatprep.subr.mxu0 0.0
        %316 = vmatpush1.msra.mxu0 0.0
        %317 = vmatprep.subr.mxu0 0.0
        %318 = vmatpush1.msra.mxu0 0.0
        %319 = vmatprep.subr.mxu0 0.0
        %320 = vmatpush1.msra.mxu0 0.0
        %321 = vmatprep.subr.mxu0 0.0
        %322 = vmatpush1.msra.mxu0 0.0
        %323 = vmatprep.subr.mxu0 0.0
        %324 = vmatpush1.msra.mxu0 0.0
        %325 = vmatprep.subr.mxu0 0.0
        %326 = vmatpush1.msra.mxu0 0.0
        %327 = vmatprep.subr.mxu0 0.0
        %328 = vmatpush1.msra.mxu0 0.0
        %329 = vmatprep.mubr.f32.mxu0 0.0
        %330 = vmatmul.mubr.f32.gmra.mrb[0].mxu0 %v263
        %v331 = vpop.f32.mrb[0].mxu0
        %v332 = vadd.f32 0.0, %v331
        %v333 = vpop.f32.mrb[0].mxu0
        %334 = vdwg.mxu0
        %v336 = vsel %vm218, %v257, 0
        %338 = vmatprep.subr.mxu0 0.0
        %339 = vmatpush1.msra.mxu0 %v236
        %340 = vmatprep.subr.mxu0 0.0
        %341 = vmatpush1.msra.mxu0 %v237
        %342 = vmatprep.subr.mxu0 0.0
        %343 = vmatpush1.msra.mxu0 0.0
        %344 = vmatprep.subr.mxu0 0.0
        %345 = vmatpush1.msra.mxu0 0.0
        %346 = vmatprep.subr.mxu0 0.0
        %347 = vmatpush1.msra.mxu0 0.0
        %348 = vmatprep.subr.mxu0 0.0
        %349 = vmatpush1.msra.mxu0 0.0
        %350 = vmatprep.subr.mxu0 0.0
        %351 = vmatpush1.msra.mxu0 0.0
        %352 = vmatprep.subr.mxu0 0.0
        %353 = vmatpush1.msra.mxu0 0.0
        %354 = vmatprep.subr.mxu0 0.0
        %355 = vmatpush1.msra.mxu0 0.0
        %356 = vmatprep.subr.mxu0 0.0
        %357 = vmatpush1.msra.mxu0 0.0
        %358 = vmatprep.subr.mxu0 0.0
        %359 = vmatpush1.msra.mxu0 0.0
        %360 = vmatprep.subr.mxu0 0.0
        %361 = vmatpush1.msra.mxu0 0.0
        %362 = vmatprep.subr.mxu0 0.0
        %363 = vmatpush1.msra.mxu0 0.0
        %364 = vmatprep.subr.mxu0 0.0
        %365 = vmatpush1.msra.mxu0 0.0
        %366 = vmatprep.subr.mxu0 0.0
        %367 = vmatpush1.msra.mxu0 0.0
        %368 = vmatprep.subr.mxu0 0.0
        %369 = vmatpush1.msra.mxu0 0.0
        %370 = vmatprep.subr.mxu0 0.0
        %371 = vmatpush1.msra.mxu0 0.0
        %372 = vmatprep.subr.mxu0 0.0
        %373 = vmatpush1.msra.mxu0 0.0
        %374 = vmatprep.subr.mxu0 0.0
        %375 = vmatpush1.msra.mxu0 0.0
        %376 = vmatprep.subr.mxu0 0.0
        %377 = vmatpush1.msra.mxu0 0.0
        %378 = vmatprep.subr.mxu0 0.0
        %379 = vmatpush1.msra.mxu0 0.0
        %380 = vmatprep.subr.mxu0 0.0
        %381 = vmatpush1.msra.mxu0 0.0
        %382 = vmatprep.subr.mxu0 0.0
        %383 = vmatpush1.msra.mxu0 0.0
        %384 = vmatprep.subr.mxu0 0.0
        %385 = vmatpush1.msra.mxu0 0.0
        %386 = vmatprep.subr.mxu0 0.0
        %387 = vmatpush1.msra.mxu0 0.0
        %388 = vmatprep.subr.mxu0 0.0
        %389 = vmatpush1.msra.mxu0 0.0
        %390 = vmatprep.subr.mxu0 0.0
        %391 = vmatpush1.msra.mxu0 0.0
        %392 = vmatprep.subr.mxu0 0.0
        %393 = vmatpush1.msra.mxu0 0.0
        %394 = vmatprep.subr.mxu0 0.0
        %395 = vmatpush1.msra.mxu0 0.0
        %396 = vmatprep.subr.mxu0 0.0
        %397 = vmatpush1.msra.mxu0 0.0
        %398 = vmatprep.subr.mxu0 0.0
        %399 = vmatpush1.msra.mxu0 0.0
        %400 = vmatprep.subr.mxu0 0.0
        %401 = vmatpush1.msra.mxu0 0.0
        %402 = vmatprep.mubr.f32.mxu0 0.0
        %403 = vmatmul.mubr.f32.gmra.mrb[0].mxu0 %v336
        %v404 = vpop.f32.mrb[0].mxu0
        %v405 = vadd.f32 %v332, %v404
        %v406 = vpop.f32.mrb[0].mxu0
        %407 = vdwg.mxu0
        %v409 = vsel %vm218, %v261, 0
        %411 = vmatprep.subr.mxu0 0.0
        %412 = vmatpush1.msra.mxu0 %v236
        %413 = vmatprep.subr.mxu0 0.0
        %414 = vmatpush1.msra.mxu0 %v237
        %415 = vmatprep.subr.mxu0 0.0
        %416 = vmatpush1.msra.mxu0 0.0
        %417 = vmatprep.subr.mxu0 0.0
        %418 = vmatpush1.msra.mxu0 0.0
        %419 = vmatprep.subr.mxu0 0.0
        %420 = vmatpush1.msra.mxu0 0.0
        %421 = vmatprep.subr.mxu0 0.0
        %422 = vmatpush1.msra.mxu0 0.0
        %423 = vmatprep.subr.mxu0 0.0
        %424 = vmatpush1.msra.mxu0 0.0
        %425 = vmatprep.subr.mxu0 0.0
        %426 = vmatpush1.msra.mxu0 0.0
        %427 = vmatprep.subr.mxu0 0.0
        %428 = vmatpush1.msra.mxu0 0.0
        %429 = vmatprep.subr.mxu0 0.0
        %430 = vmatpush1.msra.mxu0 0.0
        %431 = vmatprep.subr.mxu0 0.0
        %432 = vmatpush1.msra.mxu0 0.0
        %433 = vmatprep.subr.mxu0 0.0
        %434 = vmatpush1.msra.mxu0 0.0
        %435 = vmatprep.subr.mxu0 0.0
        %436 = vmatpush1.msra.mxu0 0.0
        %437 = vmatprep.subr.mxu0 0.0
        %438 = vmatpush1.msra.mxu0 0.0
        %439 = vmatprep.subr.mxu0 0.0
        %440 = vmatpush1.msra.mxu0 0.0
        %441 = vmatprep.subr.mxu0 0.0
        %442 = vmatpush1.msra.mxu0 0.0
        %443 = vmatprep.subr.mxu0 0.0
        %444 = vmatpush1.msra.mxu0 0.0
        %445 = vmatprep.subr.mxu0 0.0
        %446 = vmatpush1.msra.mxu0 0.0
        %447 = vmatprep.subr.mxu0 0.0
        %448 = vmatpush1.msra.mxu0 0.0
        %449 = vmatprep.subr.mxu0 0.0
        %450 = vmatpush1.msra.mxu0 0.0
        %451 = vmatprep.subr.mxu0 0.0
        %452 = vmatpush1.msra.mxu0 0.0
        %453 = vmatprep.subr.mxu0 0.0
        %454 = vmatpush1.msra.mxu0 0.0
        %455 = vmatprep.subr.mxu0 0.0
        %456 = vmatpush1.msra.mxu0 0.0
        %457 = vmatprep.subr.mxu0 0.0
        %458 = vmatpush1.msra.mxu0 0.0
        %459 = vmatprep.subr.mxu0 0.0
        %460 = vmatpush1.msra.mxu0 0.0
        %461 = vmatprep.subr.mxu0 0.0
        %462 = vmatpush1.msra.mxu0 0.0
        %463 = vmatprep.subr.mxu0 0.0
        %464 = vmatpush1.msra.mxu0 0.0
        %465 = vmatprep.subr.mxu0 0.0
        %466 = vmatpush1.msra.mxu0 0.0
        %467 = vmatprep.subr.mxu0 0.0
        %468 = vmatpush1.msra.mxu0 0.0
        %469 = vmatprep.subr.mxu0 0.0
        %470 = vmatpush1.msra.mxu0 0.0
        %471 = vmatprep.subr.mxu0 0.0
        %472 = vmatpush1.msra.mxu0 0.0
        %473 = vmatprep.subr.mxu0 0.0
        %474 = vmatpush1.msra.mxu0 0.0
        %475 = vmatprep.mubr.f32.mxu0 0.0
        %476 = vmatmul.mubr.f32.gmra.mrb[0].mxu0 %v409
        %v477 = vpop.f32.mrb[0].mxu0
        %v478 = vadd.f32 0.0, %v477
        %v479 = vpop.f32.mrb[0].mxu0
        %480 = vdwg.mxu0
        %v481 = vadd.f32 %v405, %v478
        %v482 = vsel %vm249, 1, 0
        %vm483 = vcmp.eq.s32.totalorder %v482, 1
        %v484 = vsel %vm483, %v481, %v222
        %s485 = scalar_lea.vmem %s204, %s212 [#allocation7]
        %vm486 = vcmask 128000
        %487 = vst.msk [vmem:[%s485] sm:$0x3f] %vm486, %v484
        %s488 = scalar_lea.vmem %s204, %s214 [#allocation7]
        %v489 = vld [vmem:[%s488] sm:$0x3f]
        %v490 = vpack.c.bf16 %v222, %v222
        %v491 = vunpack.c.l.bf16 %v490
        %v492 = vsub.f32 %v222, %v491
        %v493 = vpack.c.bf16 %v492, %v492
        %v494 = vunpack.c.l.bf16 %v493
        %v495 = vsub.f32 %v492, %v494
        %v497 = vsel %vm218, %v494, 0
        %499 = vmatprep.subr.mxu0 0.0
        %500 = vmatpush1.msra.mxu0 %v242
        %501 = vmatprep.subr.mxu0 0.0
        %502 = vmatpush1.msra.mxu0 %v243
        %503 = vmatprep.subr.mxu0 0.0
        %504 = vmatpush1.msra.mxu0 0.0
        %505 = vmatprep.subr.mxu0 0.0
        %506 = vmatpush1.msra.mxu0 0.0
        %507 = vmatprep.subr.mxu0 0.0
        %508 = vmatpush1.msra.mxu0 0.0
        %509 = vmatprep.subr.mxu0 0.0
        %510 = vmatpush1.msra.mxu0 0.0
        %511 = vmatprep.subr.mxu0 0.0
        %512 = vmatpush1.msra.mxu0 0.0
        %513 = vmatprep.subr.mxu0 0.0
        %514 = vmatpush1.msra.mxu0 0.0
        %515 = vmatprep.subr.mxu0 0.0
        %516 = vmatpush1.msra.mxu0 0.0
        %517 = vmatprep.subr.mxu0 0.0
        %518 = vmatpush1.msra.mxu0 0.0
        %519 = vmatprep.subr.mxu0 0.0
        %520 = vmatpush1.msra.mxu0 0.0
        %521 = vmatprep.subr.mxu0 0.0
        %522 = vmatpush1.msra.mxu0 0.0
        %523 = vmatprep.subr.mxu0 0.0
        %524 = vmatpush1.msra.mxu0 0.0
        %525 = vmatprep.subr.mxu0 0.0
        %526 = vmatpush1.msra.mxu0 0.0
        %527 = vmatprep.subr.mxu0 0.0
        %528 = vmatpush1.msra.mxu0 0.0
        %529 = vmatprep.subr.mxu0 0.0
        %530 = vmatpush1.msra.mxu0 0.0
        %531 = vmatprep.subr.mxu0 0.0
        %532 = vmatpush1.msra.mxu0 0.0
        %533 = vmatprep.subr.mxu0 0.0
        %534 = vmatpush1.msra.mxu0 0.0
        %535 = vmatprep.subr.mxu0 0.0
        %536 = vmatpush1.msra.mxu0 0.0
        %537 = vmatprep.subr.mxu0 0.0
        %538 = vmatpush1.msra.mxu0 0.0
        %539 = vmatprep.subr.mxu0 0.0
        %540 = vmatpush1.msra.mxu0 0.0
        %541 = vmatprep.subr.mxu0 0.0
        %542 = vmatpush1.msra.mxu0 0.0
        %543 = vmatprep.subr.mxu0 0.0
        %544 = vmatpush1.msra.mxu0 0.0
        %545 = vmatprep.subr.mxu0 0.0
        %546 = vmatpush1.msra.mxu0 0.0
        %547 = vmatprep.subr.mxu0 0.0
        %548 = vmatpush1.msra.mxu0 0.0
        %549 = vmatprep.subr.mxu0 0.0
        %550 = vmatpush1.msra.mxu0 0.0
        %551 = vmatprep.subr.mxu0 0.0
        %552 = vmatpush1.msra.mxu0 0.0
        %553 = vmatprep.subr.mxu0 0.0
        %554 = vmatpush1.msra.mxu0 0.0
        %555 = vmatprep.subr.mxu0 0.0
        %556 = vmatpush1.msra.mxu0 0.0
        %557 = vmatprep.subr.mxu0 0.0
        %558 = vmatpush1.msra.mxu0 0.0
        %559 = vmatprep.subr.mxu0 0.0
        %560 = vmatpush1.msra.mxu0 0.0
        %561 = vmatprep.subr.mxu0 0.0
        %562 = vmatpush1.msra.mxu0 0.0
        %563 = vmatprep.mubr.f32.mxu0 0.0
        %564 = vmatmul.mubr.f32.gmra.mrb[0].mxu0 %v497
        %v565 = vpop.f32.mrb[0].mxu0
        %v566 = vadd.f32 0.0, %v565
        %v567 = vpop.f32.mrb[0].mxu0
        %568 = vdwg.mxu0
        %v570 = vsel %vm218, %v491, 0
        %572 = vmatprep.subr.mxu0 0.0
        %573 = vmatpush1.msra.mxu0 %v242
        %574 = vmatprep.subr.mxu0 0.0
        %575 = vmatpush1.msra.mxu0 %v243
        %576 = vmatprep.subr.mxu0 0.0
        %577 = vmatpush1.msra.mxu0 0.0
        %578 = vmatprep.subr.mxu0 0.0
        %579 = vmatpush1.msra.mxu0 0.0
        %580 = vmatprep.subr.mxu0 0.0
        %581 = vmatpush1.msra.mxu0 0.0
        %582 = vmatprep.subr.mxu0 0.0
        %583 = vmatpush1.msra.mxu0 0.0
        %584 = vmatprep.subr.mxu0 0.0
        %585 = vmatpush1.msra.mxu0 0.0
        %586 = vmatprep.subr.mxu0 0.0
        %587 = vmatpush1.msra.mxu0 0.0
        %588 = vmatprep.subr.mxu0 0.0
        %589 = vmatpush1.msra.mxu0 0.0
        %590 = vmatprep.subr.mxu0 0.0
        %591 = vmatpush1.msra.mxu0 0.0
        %592 = vmatprep.subr.mxu0 0.0
        %593 = vmatpush1.msra.mxu0 0.0
        %594 = vmatprep.subr.mxu0 0.0
        %595 = vmatpush1.msra.mxu0 0.0
        %596 = vmatprep.subr.mxu0 0.0
        %597 = vmatpush1.msra.mxu0 0.0
        %598 = vmatprep.subr.mxu0 0.0
        %599 = vmatpush1.msra.mxu0 0.0
        %600 = vmatprep.subr.mxu0 0.0
        %601 = vmatpush1.msra.mxu0 0.0
        %602 = vmatprep.subr.mxu0 0.0
        %603 = vmatpush1.msra.mxu0 0.0
        %604 = vmatprep.subr.mxu0 0.0
        %605 = vmatpush1.msra.mxu0 0.0
        %606 = vmatprep.subr.mxu0 0.0
        %607 = vmatpush1.msra.mxu0 0.0
        %608 = vmatprep.subr.mxu0 0.0
        %609 = vmatpush1.msra.mxu0 0.0
        %610 = vmatprep.subr.mxu0 0.0
        %611 = vmatpush1.msra.mxu0 0.0
        %612 = vmatprep.subr.mxu0 0.0
        %613 = vmatpush1.msra.mxu0 0.0
        %614 = vmatprep.subr.mxu0 0.0
        %615 = vmatpush1.msra.mxu0 0.0
        %616 = vmatprep.subr.mxu0 0.0
        %617 = vmatpush1.msra.mxu0 0.0
        %618 = vmatprep.subr.mxu0 0.0
        %619 = vmatpush1.msra.mxu0 0.0
        %620 = vmatprep.subr.mxu0 0.0
        %621 = vmatpush1.msra.mxu0 0.0
        %622 = vmatprep.subr.mxu0 0.0
        %623 = vmatpush1.msra.mxu0 0.0
        %624 = vmatprep.subr.mxu0 0.0
        %625 = vmatpush1.msra.mxu0 0.0
        %626 = vmatprep.subr.mxu0 0.0
        %627 = vmatpush1.msra.mxu0 0.0
        %628 = vmatprep.subr.mxu0 0.0
        %629 = vmatpush1.msra.mxu0 0.0
        %630 = vmatprep.subr.mxu0 0.0
        %631 = vmatpush1.msra.mxu0 0.0
        %632 = vmatprep.subr.mxu0 0.0
        %633 = vmatpush1.msra.mxu0 0.0
        %634 = vmatprep.subr.mxu0 0.0
        %635 = vmatpush1.msra.mxu0 0.0
        %636 = vmatprep.mubr.f32.mxu0 0.0
        %637 = vmatmul.mubr.f32.gmra.mrb[0].mxu0 %v570
        %v638 = vpop.f32.mrb[0].mxu0
        %v639 = vadd.f32 %v566, %v638
        %v640 = vpop.f32.mrb[0].mxu0
        %641 = vdwg.mxu0
        %v643 = vsel %vm218, %v495, 0
        %645 = vmatprep.subr.mxu0 0.0
        %646 = vmatpush1.msra.mxu0 %v242
        %647 = vmatprep.subr.mxu0 0.0
        %648 = vmatpush1.msra.mxu0 %v243
        %649 = vmatprep.subr.mxu0 0.0
        %650 = vmatpush1.msra.mxu0 0.0
        %651 = vmatprep.subr.mxu0 0.0
        %652 = vmatpush1.msra.mxu0 0.0
        %653 = vmatprep.subr.mxu0 0.0
        %654 = vmatpush1.msra.mxu0 0.0
        %655 = vmatprep.subr.mxu0 0.0
        %656 = vmatpush1.msra.mxu0 0.0
        %657 = vmatprep.subr.mxu0 0.0
        %658 = vmatpush1.msra.mxu0 0.0
        %659 = vmatprep.subr.mxu0 0.0
        %660 = vmatpush1.msra.mxu0 0.0
        %661 = vmatprep.subr.mxu0 0.0
        %662 = vmatpush1.msra.mxu0 0.0
        %663 = vmatprep.subr.mxu0 0.0
        %664 = vmatpush1.msra.mxu0 0.0
        %665 = vmatprep.subr.mxu0 0.0
        %666 = vmatpush1.msra.mxu0 0.0
        %667 = vmatprep.subr.mxu0 0.0
        %668 = vmatpush1.msra.mxu0 0.0
        %669 = vmatprep.subr.mxu0 0.0
        %670 = vmatpush1.msra.mxu0 0.0
        %671 = vmatprep.subr.mxu0 0.0
        %672 = vmatpush1.msra.mxu0 0.0
        %673 = vmatprep.subr.mxu0 0.0
        %674 = vmatpush1.msra.mxu0 0.0
        %675 = vmatprep.subr.mxu0 0.0
        %676 = vmatpush1.msra.mxu0 0.0
        %677 = vmatprep.subr.mxu0 0.0
        %678 = vmatpush1.msra.mxu0 0.0
        %679 = vmatprep.subr.mxu0 0.0
        %680 = vmatpush1.msra.mxu0 0.0
        %681 = vmatprep.subr.mxu0 0.0
        %682 = vmatpush1.msra.mxu0 0.0
        %683 = vmatprep.subr.mxu0 0.0
        %684 = vmatpush1.msra.mxu0 0.0
        %685 = vmatprep.subr.mxu0 0.0
        %686 = vmatpush1.msra.mxu0 0.0
        %687 = vmatprep.subr.mxu0 0.0
        %688 = vmatpush1.msra.mxu0 0.0
        %689 = vmatprep.subr.mxu0 0.0
        %690 = vmatpush1.msra.mxu0 0.0
        %691 = vmatprep.subr.mxu0 0.0
        %692 = vmatpush1.msra.mxu0 0.0
        %693 = vmatprep.subr.mxu0 0.0
        %694 = vmatpush1.msra.mxu0 0.0
        %695 = vmatprep.subr.mxu0 0.0
        %696 = vmatpush1.msra.mxu0 0.0
        %697 = vmatprep.subr.mxu0 0.0
        %698 = vmatpush1.msra.mxu0 0.0
        %699 = vmatprep.subr.mxu0 0.0
        %700 = vmatpush1.msra.mxu0 0.0
        %701 = vmatprep.subr.mxu0 0.0
        %702 = vmatpush1.msra.mxu0 0.0
        %703 = vmatprep.subr.mxu0 0.0
        %704 = vmatpush1.msra.mxu0 0.0
        %705 = vmatprep.subr.mxu0 0.0
        %706 = vmatpush1.msra.mxu0 0.0
        %707 = vmatprep.subr.mxu0 0.0
        %708 = vmatpush1.msra.mxu0 0.0
        %709 = vmatprep.mubr.f32.mxu0 0.0
        %710 = vmatmul.mubr.f32.gmra.mrb[0].mxu0 %v643
        %v711 = vpop.f32.mrb[0].mxu0
        %v712 = vadd.f32 0.0, %v711
        %v713 = vpop.f32.mrb[0].mxu0
        %714 = vdwg.mxu0
        %v715 = vadd.f32 %v639, %v712
        %v716 = vsel %vm255, 1, 0
        %vm717 = vcmp.eq.s32.totalorder %v716, 1
        %v718 = vsel %vm717, %v715, %v489
        %719 = vst.msk [vmem:[%s488] sm:$0x3f] %vm486, %v718
        %s720 = sadd.s32 %s212, 6
        %s721 = ssub.s32 %s213, 2
        %s722 = sadd.s32 %s213, 2
        %s723 = ssub.s32 %s212, 2
        %s724 = sadd.s32 %s212, 2
        %s725 = sadd.s32 %s213, 4
        %s726 = sadd.s32 %s213, 8
        %s727 = sadd.s32 %s212, 4
        %s728 = sadd.s32 %s212, 8
        %s729 = sadd.s32 %s214, 6
        %s730 = ssub.s32 %s215, 2
        %s731 = sadd.s32 %s215, 2
        %s732 = ssub.s32 %s214, 2
        %s733 = sadd.s32 %s214, 2
        %s734 = sadd.s32 %s215, 4
        %s735 = sadd.s32 %s215, 8
        %s736 = sadd.s32 %s214, 4
        %s737 = sadd.s32 %s214, 8
        %p738 = scmp.lt.s32.totalorder %s212, 0
        %s739 = sadd.s32 %s212, 16
        %s740 = scalar_select %p738, %s739, %s212
        %p741 = scmp.gt.s32.totalorder %s740, 0
        %s742 = scalar_select %p741, %s740, 0
        %p743 = scmp.lt.s32.totalorder %s742, 16
        %s744 = scalar_select %p743, %s742, 16
        %p745 = scmp.lt.s32.totalorder %s720, 0
        %s746 = sadd.s32 %s212, 22
        %s747 = scalar_select %p745, %s746, %s720
        %p748 = scmp.gt.s32.totalorder %s747, 0
        %s749 = scalar_select %p748, %s747, 0
        %p750 = scmp.lt.s32.totalorder %s749, 16
        %s751 = scalar_select %p750, %s749, 16
        %p752 = scmp.lt.s32.totalorder %s721, 0
        %s753 = sadd.s32 %s213, 14
        %s754 = scalar_select %p752, %s753, %s721
        %p755 = scmp.gt.s32.totalorder %s754, 0
        %s756 = scalar_select %p755, %s754, 0
        %p757 = scmp.lt.s32.totalorder %s756, 16
        %s758 = scalar_select %p757, %s756, 16
        %p759 = scmp.lt.s32.totalorder %s722, 0
        %s760 = sadd.s32 %s213, 18
        %s761 = scalar_select %p759, %s760, %s722
        %p762 = scmp.gt.s32.totalorder %s761, 0
        %s763 = scalar_select %p762, %s761, 0
        %p764 = scmp.lt.s32.totalorder %s763, 16
        %s765 = scalar_select %p764, %s763, 16
        %p766 = scmp.lt.s32.totalorder %s723, 0
        %s767 = sadd.s32 %s212, 14
        %s768 = scalar_select %p766, %s767, %s723
        %p769 = scmp.gt.s32.totalorder %s768, 0
        %s770 = scalar_select %p769, %s768, 0
        %p771 = scmp.lt.s32.totalorder %s770, 16
        %s772 = scalar_select %p771, %s770, 16
        %p773 = scmp.lt.s32.totalorder %s724, 0
        %s774 = sadd.s32 %s212, 18
        %s775 = scalar_select %p773, %s774, %s724
        %p776 = scmp.gt.s32.totalorder %s775, 0
        %s777 = scalar_select %p776, %s775, 0
        %p778 = scmp.lt.s32.totalorder %s777, 16
        %s779 = scalar_select %p778, %s777, 16
        %p780 = scmp.lt.s32.totalorder %s213, 0
        %s781 = sadd.s32 %s213, 16
        %s782 = scalar_select %p780, %s781, %s213
        %p783 = scmp.gt.s32.totalorder %s782, 0
        %s784 = scalar_select %p783, %s782, 0
        %p785 = scmp.lt.s32.totalorder %s784, 16
        %s786 = scalar_select %p785, %s784, 16
        %p787 = scmp.lt.s32.totalorder %s246, 0
        %s788 = sadd.s32 %s213, 22
        %s789 = scalar_select %p787, %s788, %s246
        %p790 = scmp.gt.s32.totalorder %s789, 0
        %s791 = scalar_select %p790, %s789, 0
        %p792 = scmp.lt.s32.totalorder %s791, 16
        %s793 = scalar_select %p792, %s791, 16
        %p794 = scmp.lt.s32.totalorder %s725, 0
        %s795 = sadd.s32 %s213, 20
        %s796 = scalar_select %p794, %s795, %s725
        %p797 = scmp.gt.s32.totalorder %s796, 0
        %s798 = scalar_select %p797, %s796, 0
        %p799 = scmp.lt.s32.totalorder %s798, 16
        %s800 = scalar_select %p799, %s798, 16
        %p801 = scmp.lt.s32.totalorder %s726, 0
        %s802 = sadd.s32 %s213, 24
        %s803 = scalar_select %p801, %s802, %s726
        %p804 = scmp.gt.s32.totalorder %s803, 0
        %s805 = scalar_select %p804, %s803, 0
        %p806 = scmp.lt.s32.totalorder %s805, 16
        %s807 = scalar_select %p806, %s805, 16
        %p808 = scmp.lt.s32.totalorder %s727, 0
        %s809 = sadd.s32 %s212, 20
        %s810 = scalar_select %p808, %s809, %s727
        %p811 = scmp.gt.s32.totalorder %s810, 0
        %s812 = scalar_select %p811, %s810, 0
        %p813 = scmp.lt.s32.totalorder %s812, 16
        %s814 = scalar_select %p813, %s812, 16
        %p815 = scmp.lt.s32.totalorder %s728, 0
        %s816 = sadd.s32 %s212, 24
        %s817 = scalar_select %p815, %s816, %s728
        %p818 = scmp.gt.s32.totalorder %s817, 0
        %s819 = scalar_select %p818, %s817, 0
        %p820 = scmp.lt.s32.totalorder %s819, 16
        %s821 = scalar_select %p820, %s819, 16
        %p822 = scmp.lt.s32.totalorder %s214, 0
        %s823 = sadd.s32 %s214, 16
        %s824 = scalar_select %p822, %s823, %s214
        %p825 = scmp.gt.s32.totalorder %s824, 0
        %s826 = scalar_select %p825, %s824, 0
        %p827 = scmp.lt.s32.totalorder %s826, 16
        %s828 = scalar_select %p827, %s826, 16
        %p829 = scmp.lt.s32.totalorder %s729, 0
        %s830 = sadd.s32 %s214, 22
        %s831 = scalar_select %p829, %s830, %s729
        %p832 = scmp.gt.s32.totalorder %s831, 0
        %s833 = scalar_select %p832, %s831, 0
        %p834 = scmp.lt.s32.totalorder %s833, 16
        %s835 = scalar_select %p834, %s833, 16
        %p836 = scmp.lt.s32.totalorder %s730, 0
        %s837 = sadd.s32 %s215, 14
        %s838 = scalar_select %p836, %s837, %s730
        %p839 = scmp.gt.s32.totalorder %s838, 0
        %s840 = scalar_select %p839, %s838, 0
        %p841 = scmp.lt.s32.totalorder %s840, 16
        %s842 = scalar_select %p841, %s840, 16
        %p843 = scmp.lt.s32.totalorder %s731, 0
        %s844 = sadd.s32 %s215, 18
        %s845 = scalar_select %p843, %s844, %s731
        %p846 = scmp.gt.s32.totalorder %s845, 0
        %s847 = scalar_select %p846, %s845, 0
        %p848 = scmp.lt.s32.totalorder %s847, 16
        %s849 = scalar_select %p848, %s847, 16
        %p850 = scmp.lt.s32.totalorder %s732, 0
        %s851 = sadd.s32 %s214, 14
        %s852 = scalar_select %p850, %s851, %s732
        %p853 = scmp.gt.s32.totalorder %s852, 0
        %s854 = scalar_select %p853, %s852, 0
        %p855 = scmp.lt.s32.totalorder %s854, 16
        %s856 = scalar_select %p855, %s854, 16
        %p857 = scmp.lt.s32.totalorder %s733, 0
        %s858 = sadd.s32 %s214, 18
        %s859 = scalar_select %p857, %s858, %s733
        %p860 = scmp.gt.s32.totalorder %s859, 0
        %s861 = scalar_select %p860, %s859, 0
        %p862 = scmp.lt.s32.totalorder %s861, 16
        %s863 = scalar_select %p862, %s861, 16
        %p864 = scmp.lt.s32.totalorder %s215, 0
        %s865 = sadd.s32 %s215, 16
        %s866 = scalar_select %p864, %s865, %s215
        %p867 = scmp.gt.s32.totalorder %s866, 0
        %s868 = scalar_select %p867, %s866, 0
        %p869 = scmp.lt.s32.totalorder %s868, 16
        %s870 = scalar_select %p869, %s868, 16
        %p871 = scmp.lt.s32.totalorder %s252, 0
        %s872 = sadd.s32 %s215, 22
        %s873 = scalar_select %p871, %s872, %s252
        %p874 = scmp.gt.s32.totalorder %s873, 0
        %s875 = scalar_select %p874, %s873, 0
        %p876 = scmp.lt.s32.totalorder %s875, 16
        %s877 = scalar_select %p876, %s875, 16
        %p878 = scmp.lt.s32.totalorder %s734, 0
        %s879 = sadd.s32 %s215, 20
        %s880 = scalar_select %p878, %s879, %s734
        %p881 = scmp.gt.s32.totalorder %s880, 0
        %s882 = scalar_select %p881, %s880, 0
        %p883 = scmp.lt.s32.totalorder %s882, 16
        %s884 = scalar_select %p883, %s882, 16
        %p885 = scmp.lt.s32.totalorder %s735, 0
        %s886 = sadd.s32 %s215, 24
        %s887 = scalar_select %p885, %s886, %s735
        %p888 = scmp.gt.s32.totalorder %s887, 0
        %s889 = scalar_select %p888, %s887, 0
        %p890 = scmp.lt.s32.totalorder %s889, 16
        %s891 = scalar_select %p890, %s889, 16
        %p892 = scmp.lt.s32.totalorder %s736, 0
        %s893 = sadd.s32 %s214, 20
        %s894 = scalar_select %p892, %s893, %s736
        %p895 = scmp.gt.s32.totalorder %s894, 0
        %s896 = scalar_select %p895, %s894, 0
        %p897 = scmp.lt.s32.totalorder %s896, 16
        %s898 = scalar_select %p897, %s896, 16
        %p899 = scmp.lt.s32.totalorder %s737, 0
        %s900 = sadd.s32 %s214, 24
        %s901 = scalar_select %p899, %s900, %s737
        %p902 = scmp.gt.s32.totalorder %s901, 0
        %s903 = scalar_select %p902, %s901, 0
        %p904 = scmp.lt.s32.totalorder %s903, 16
        %s905 = scalar_select %p904, %s903, 16
        %v906 = vstv %s744
        %vm907 = vcmp.ge.s32.totalorder %v226, %v906
        %vm908 = vcmp.ge.s32.totalorder %v227, %v906
        %v909 = vstv %s751
        %vm910 = vcmp.lt.s32.totalorder %v226, %v909
        %vm911 = vcmp.lt.s32.totalorder %v227, %v909
        %vm912 = vmand %vm907, %vm910
        %vm913 = vmand %vm908, %vm911
        %v914 = vstv %s758
        %vm915 = vcmp.ge.s32.totalorder %v229, %v914
        %vm916 = vmand %vm912, %vm915
        %vm917 = vmand %vm913, %vm915
        %v918 = vstv %s765
        %vm919 = vcmp.lt.s32.totalorder %v229, %v918
        %vm920 = vmand %vm916, %vm919
        %vm921 = vmand %vm917, %vm919
        %v922 = vstv %s772
        %vm923 = vcmp.ge.s32.totalorder %v226, %v922
        %vm924 = vcmp.ge.s32.totalorder %v227, %v922
        %v925 = vstv %s779
        %vm926 = vcmp.lt.s32.totalorder %v226, %v925
        %vm927 = vcmp.lt.s32.totalorder %v227, %v925
        %vm928 = vmand %vm923, %vm926
        %vm929 = vmand %vm924, %vm927
        %v930 = vstv %s786
        %vm931 = vcmp.ge.s32.totalorder %v229, %v930
        %vm932 = vmand %vm928, %vm931
        %vm933 = vmand %vm929, %vm931
        %v934 = vstv %s793
        %vm935 = vcmp.lt.s32.totalorder %v229, %v934
        %vm936 = vmand %vm932, %vm935
        %vm937 = vmand %vm933, %vm935
        %vm938 = vmor %vm920, %vm936
        %vm939 = vmor %vm921, %vm937
        %v940 = vstv %s800
        %vm941 = vcmp.ge.s32.totalorder %v229, %v940
        %vm942 = vmand %vm912, %vm941
        %vm943 = vmand %vm913, %vm941
        %v944 = vstv %s807
        %vm945 = vcmp.lt.s32.totalorder %v229, %v944
        %vm946 = vmand %vm942, %vm945
        %vm947 = vmand %vm943, %vm945
        %vm948 = vmor %vm938, %vm946
        %vm949 = vmor %vm939, %vm947
        %v950 = vstv %s814
        %vm951 = vcmp.ge.s32.totalorder %v226, %v950
        %vm952 = vcmp.ge.s32.totalorder %v227, %v950
        %v953 = vstv %s821
        %vm954 = vcmp.lt.s32.totalorder %v226, %v953
        %vm955 = vcmp.lt.s32.totalorder %v227, %v953
        %vm956 = vmand %vm951, %vm954
        %vm957 = vmand %vm952, %vm955
        %vm958 = vmand %vm956, %vm931
        %vm959 = vmand %vm957, %vm931
        %vm960 = vmand %vm958, %vm935
        %vm961 = vmand %vm959, %vm935
        %vm962 = vmor %vm948, %vm960
        %vm963 = vmor %vm949, %vm961
        %v964 = vstv %s828
        %vm965 = vcmp.ge.s32.totalorder %v226, %v964
        %vm966 = vcmp.ge.s32.totalorder %v227, %v964
        %v967 = vstv %s835
        %vm968 = vcmp.lt.s32.totalorder %v226, %v967
        %vm969 = vcmp.lt.s32.totalorder %v227, %v967
        %vm970 = vmand %vm965, %vm968
        %vm971 = vmand %vm966, %vm969
        %v972 = vstv %s842
        %vm973 = vcmp.ge.s32.totalorder %v229, %v972
        %vm974 = vmand %vm970, %vm973
        %vm975 = vmand %vm971, %vm973
        %v976 = vstv %s849
        %vm977 = vcmp.lt.s32.totalorder %v229, %v976
        %vm978 = vmand %vm974, %vm977
        %vm979 = vmand %vm975, %vm977
        %vm980 = vmor %vm962, %vm978
        %vm981 = vmor %vm963, %vm979
        %v982 = vstv %s856
        %vm983 = vcmp.ge.s32.totalorder %v226, %v982
        %vm984 = vcmp.ge.s32.totalorder %v227, %v982
        %v985 = vstv %s863
        %vm986 = vcmp.lt.s32.totalorder %v226, %v985
        %vm987 = vcmp.lt.s32.totalorder %v227, %v985
        %vm988 = vmand %vm983, %vm986
        %vm989 = vmand %vm984, %vm987
        %v990 = vstv %s870
        %vm991 = vcmp.ge.s32.totalorder %v229, %v990
        %vm992 = vmand %vm988, %vm991
        %vm993 = vmand %vm989, %vm991
        %v994 = vstv %s877
        %vm995 = vcmp.lt.s32.totalorder %v229, %v994
        %vm996 = vmand %vm992, %vm995
        %vm997 = vmand %vm993, %vm995
        %vm998 = vmor %vm980, %vm996
        %vm999 = vmor %vm981, %vm997
        %v1000 = vstv %s884
        %vm1001 = vcmp.ge.s32.totalorder %v229, %v1000
        %vm1002 = vmand %vm970, %vm1001
        %vm1003 = vmand %vm971, %vm1001
        %v1004 = vstv %s891
        %vm1005 = vcmp.lt.s32.totalorder %v229, %v1004
        %vm1006 = vmand %vm1002, %vm1005
        %vm1007 = vmand %vm1003, %vm1005
        %vm1008 = vmor %vm998, %vm1006
        %vm1009 = vmor %vm999, %vm1007
        %v1010 = vstv %s898
        %vm1011 = vcmp.ge.s32.totalorder %v226, %v1010
        %vm1012 = vcmp.ge.s32.totalorder %v227, %v1010
        %v1013 = vstv %s905
        %vm1014 = vcmp.lt.s32.totalorder %v226, %v1013
        %vm1015 = vcmp.lt.s32.totalorder %v227, %v1013
        %vm1016 = vmand %vm1011, %vm1014
        %vm1017 = vmand %vm1012, %vm1015
        %vm1018 = vmand %vm1016, %vm991
        %vm1019 = vmand %vm1017, %vm991
        %vm1020 = vmand %vm1018, %vm995
        %vm1021 = vmand %vm1019, %vm995
        %vm1022 = vmor %vm1008, %vm1020
        %vm1023 = vmor %vm1009, %vm1021
        %v1024 = vsel %vm1022, 0.0, 1.0
        %v1025 = vsel %vm1023, 0.0, 1.0
        %1026 = vst.msk [vmem:[%s211] sm:$0xff] %vm218, %v1024
        %1027 = vst.msk [vmem:[%s211 + $0x8] sm:$0xff] %vm218, %v1025
        %s1028 = sand.u32 %s80, 1
        %s1029 = scalar_lea.sflag [#allocation4], %s1028
        %s1030 = sand.u32 %s80, 1
        %s1031 = smul.addr %s1030, 16
        %s1032 = scalar_lea.vmem [#allocation7], %s1031
        %s1033 = sand.u32 %s106, 1
        %s1034 = scalar_lea.sflag [#allocation9], %s1033
        %s1035 = sand.u32 %s106, 1
        %s1036 = smul.addr %s1035, 16
        %s1037 = scalar_lea.vmem [#allocation8], %s1036
        // Predicated region
        $region37: #{tpu_custom_call.1} parent=27 // pred_check
          %p1038 = pneg %p90
        $region38: #{tpu_custom_call.1} parent=27 // pred_check_branch
          %1040 = sbr.rel (%p1038) target = $region40
        $region39: #{tpu_custom_call.1} parent=27 // pred_region
          %s1042 = ssub.s32 256, 256
          %1043 = vsyncadd %s1029, %s1042
          %s1044 = smul.addr %s25, 2
          %s1045 = smul.addr %s1044, 128
          %s1046 = scalar_lea.hbm %s2, %s1045
          %s1047 = sshll.u32 %s1032, 4
          %s1048 = int_to_ptr.vmem [resolvable:$true] %s1047
          %1053 = dma.vmem_to_hbm [thread:$0]  %s1048, 256, %s1046, %s1029, 128, 128, 8
        $region40: #{tpu_custom_call.1} parent=27 // pred_fallthru
          _
        // Predicated region
        $region41: #{tpu_custom_call.1} parent=27 // pred_check
          %p1054 = pneg %p116
        $region42: #{tpu_custom_call.1} parent=27 // pred_check_branch
          %1056 = sbr.rel (%p1054) target = $region44
        $region43: #{tpu_custom_call.1} parent=27 // pred_region
          %s1058 = ssub.s32 256, 256
          %1059 = vsyncadd %s1034, %s1058
          %s1060 = smul.addr %s25, 2
          %s1061 = smul.addr %s1060, 128
          %s1062 = scalar_lea.hbm %s3, %s1061
          %s1063 = sshll.u32 %s1037, 4
          %s1064 = int_to_ptr.vmem [resolvable:$true] %s1063
          %1069 = dma.vmem_to_hbm [thread:$0]  %s1064, 256, %s1062, %s1034, 128, 128, 8
        $region44: #{tpu_custom_call.1} parent=27 // pred_fallthru
          _
      $region28: #{tpu_custom_call.1} parent=5 // pred_fallthru
        _
      %p1070 = scmp.le.s32.totalorder 2, %s20
      // Predicated region
      $region45: #{tpu_custom_call.1} parent=5 // pred_check
        %p1071 = pneg %p1070
      $region46: #{tpu_custom_call.1} parent=5 // pred_check_branch
        %1073 = sbr.rel (%p1071) target = $region48
      $region47: #{tpu_custom_call.1} parent=5 // pred_region
        %s1074 = ssub.s32 %s20, 2
        // Predicated region
        $region49: #{tpu_custom_call.1} parent=47 // pred_check
          %p1075 = pneg %p96
        $region50: #{tpu_custom_call.1} parent=47 // pred_check_branch
          %1077 = sbr.rel (%p1075) target = $region52
        $region51: #{tpu_custom_call.1} parent=47 // pred_region
          %s1078 = sand.u32 %s81, 1
          %s1079 = scalar_lea.sflag [#allocation4], %s1078
          %s1080 = sand.u32 %s81, 1
          %s1081 = smul.addr %s1080, 16
          %s1082 = scalar_lea.vmem [#allocation7], %s1081
          %1083 = dma.done %s1079, 256
        $region52: #{tpu_custom_call.1} parent=47 // pred_fallthru
          _
        // Predicated region
        $region53: #{tpu_custom_call.1} parent=47 // pred_check
          %p1084 = pneg %p122
        $region54: #{tpu_custom_call.1} parent=47 // pred_check_branch
          %1086 = sbr.rel (%p1084) target = $region56
        $region55: #{tpu_custom_call.1} parent=47 // pred_region
          %s1087 = sand.u32 %s107, 1
          %s1088 = scalar_lea.sflag [#allocation9], %s1087
          %s1089 = sand.u32 %s107, 1
          %s1090 = smul.addr %s1089, 16
          %s1091 = scalar_lea.vmem [#allocation8], %s1090
          %1092 = dma.done %s1088, 256
        $region56: #{tpu_custom_call.1} parent=47 // pred_fallthru
          _
      $region48: #{tpu_custom_call.1} parent=5 // pred_fallthru
        _
    $region6: #{tpu_custom_call.1} parent=1 // loop_footer
      %s24 = sadd.s32 1, %s20
    $region7: #{tpu_custom_call.1} parent=1 // loop_footer_branch
      %19 = sbr.rel target = $region3
    $region8: #{tpu_custom_call.1} parent=1 // loop_exit
      _
    %1093 = vsyncpa [#allocation3], 1
    %s1094 = scalar_lea.sflag [#allocation3], 1
    %1095 = vsyncpa %s1094, 1
    %1096 = vsyncpa [#allocation4], 1
    %s1097 = scalar_lea.sflag [#allocation4], 1
    %1098 = vsyncpa %s1097, 1
    %1099 = vsyncpa [#allocation9], 1
    %s1100 = scalar_lea.sflag [#allocation9], 1
    %1101 = vsyncpa %s1100, 1
    %1102 = vsyncpa [#allocation5], 1
    %s1103 = scalar_lea.sflag [#allocation5], 1
    %1104 = vsyncpa %s1103, 1

</llo_original>
